<compile_context>
chip_gen: v6e
topology: v6e:2x2x1
jax: 0.10.0
libtpu: 0.0.40
codegen_flags: <defaults>
</compile_context>

<pallas_src>
import jax
import jax.numpy as jnp
from jax.experimental import pallas as pl
from jax.experimental.pallas import tpu as pltpu

IN_FEATURES = 512           # ResidualBlock(512) as used by the source model
BN_EPS = 1e-5
PARAM_DTYPE = jnp.bfloat16  # bf16 weights, fp32 MXU accumulation


def _round_up(n, m):
    return ((n + m - 1) // m) * m


def _pick_block_batch(batch):
    """Batch-tile heuristic.

    Large batches: 512-row tiles amortize the ~0.35 us per-grid-step overhead.
    Small batches: aim for >= 2 tiles so v7x can shard the batch grid across
    its two TensorCores (harmless on single-TC v5e/v6e).  Multiples of 16 keep
    bf16 output tiles on the native (16, 128) layout.
    """
    tb = min(512, _round_up(pl.cdiv(max(batch, 1), 2), 16))
    return max(tb, 16)


# ------------------------------ Pallas kernel ------------------------------ #
def residual_block_kernel(x_ref, wa_ref, ca_ref, wb_ref, cb_ref, o_ref):
    x = x_ref[...]                                    # (TB, F) f32
    xb = x.astype(wa_ref.dtype)                       # bf16 copy for the MXU

    # Linear1 (BN1 scale pre-folded into wa) + shift + ReLU   [f32 accumulate]
    y = jnp.dot(xb, wa_ref[...], preferred_element_type=jnp.float32)
    y = jnp.maximum(y + ca_ref[...], 0.0)

    # Linear2 (BN2 scale pre-folded into wb) + shift           [f32 accumulate]
    y = jnp.dot(y.astype(wb_ref.dtype), wb_ref[...],
                preferred_element_type=jnp.float32)
    y = y + cb_ref[...]

    # exact f32 residual add + ReLU, then cast once at the store (bf16 out)
    o_ref[...] = jnp.maximum(y + x, 0.0).astype(o_ref.dtype)


# ------------------------------ JAX wrapper -------------------------------- #
def residual_block_forward(x, params, *, block_batch=None):
    wa, ca, wb, cb = params
    B, F = x.shape
    x = x.astype(jnp.float32)

    tb = _pick_block_batch(B) if block_batch is None else block_batch
    pad_b = _round_up(B, tb)
    xk = x if pad_b == B else jnp.pad(x, ((0, pad_b - B), (0, 0)))

    act_in_spec = pl.BlockSpec((tb, F), lambda i: (i, 0))    # batch-tiled f32 in
    act_out_spec = pl.BlockSpec((tb, F), lambda i: (i, 0))   # batch-tiled bf16 out
    w_spec = pl.BlockSpec((F, F), lambda i: (0, 0))          # VMEM-resident weights
    s_spec = pl.BlockSpec((1, F), lambda i: (0, 0))          # VMEM-resident shifts

    out = pl.pallas_call(
        residual_block_kernel,
        out_shape=jax.ShapeDtypeStruct((pad_b, F), jnp.bfloat16),
        grid_spec=pltpu.PrefetchScalarGridSpec(
            num_scalar_prefetch=0,
            grid=(pad_b // tb,),
            in_specs=[act_in_spec, w_spec, s_spec, w_spec, s_spec],
            out_specs=act_out_spec,
        ),
        compiler_params=pltpu.CompilerParams(
            dimension_semantics=("parallel",),
        ),
    )(xk, wa, ca, wb, cb)

    return out[:B]


# --------------------------- parameter construction ------------------------ #
def make_residual_block_params(key, in_features=IN_FEATURES, dtype=PARAM_DTYPE):
    """Torch-default Linear init + fresh BatchNorm1d, folded into (W*scale, shift)."""
    def linear_bn(k):
        kw, kb = jax.random.split(k)
        bound = 1.0 / float(in_features) ** 0.5
        w = jax.random.uniform(kw, (in_features, in_features), jnp.float32,
                               -bound, bound)
        b = jax.random.uniform(kb, (in_features,), jnp.float32, -bound, bound)
        gamma = jnp.ones((in_features,), jnp.float32)
        beta = jnp.zeros((in_features,), jnp.float32)
        run_mean = jnp.zeros((in_features,), jnp.float32)
        run_var = jnp.ones((in_features,), jnp.float32)
        scale = gamma / jnp.sqrt(run_var + BN_EPS)
        w_folded = (w * scale[None, :]).astype(dtype)         # fold BN scale into W
        shift = ((b - run_mean) * scale + beta)[None, :].astype(jnp.float32)
        return w_folded, shift

    k1, k2 = jax.random.split(key)
    wa, ca = linear_bn(k1)
    wb, cb = linear_bn(k2)
    return wa, ca, wb, cb


# ------------------------------ pure-JAX reference -------------------------- #
def residual_block_reference(x, params):
    wa, ca, wb, cb = params
    x = x.astype(jnp.float32)
    y = jnp.dot(x.astype(wa.dtype), wa, preferred_element_type=jnp.float32) + ca
    y = jnp.maximum(y, 0.0)
    y = jnp.dot(y.astype(wb.dtype), wb, preferred_element_type=jnp.float32) + cb
    return jnp.maximum(y + x, 0.0)                            # f32 reference


# ----------------------------------- main ----------------------------------- #
if __name__ == "__main__":
    key = jax.random.PRNGKey(0)
    k_x, k_p = jax.random.split(key)

    batch = 100                       # deliberately not a multiple of the tile
    x = jax.random.normal(k_x, (batch, IN_FEATURES), dtype=jnp.float32)
    params = make_residual_block_params(k_p, IN_FEATURES)

    # Auto tile -> tb=64, padded batch 128, 2 grid steps (exercises tiling,
    # padding, and the >=2-step megacore split).
    out = residual_block_forward(x, params)
    out = jax.block_until_ready(out)

    ref = residual_block_reference(x, params)
    assert out.shape == (batch, IN_FEATURES), out.shape
    assert out.dtype == jnp.bfloat16, out.dtype
    out_f32 = out.astype(jnp.float32)
    max_err = float(jnp.max(jnp.abs(out_f32 - ref)))
    assert jnp.allclose(out_f32, ref, atol=3e-2, rtol=3e-2), max_err

    print("KERNEL_OK")
</pallas_src>

<mosaic_0001>
module attributes {stable_mosaic.version = 11 : i64} {
  func.func @residual_block_kernel(%arg0: i32, %arg1: memref<64x512xf32, #tpu.memory_space<vmem>>, %arg2: memref<512x512xbf16, #tpu.memory_space<vmem>>, %arg3: memref<1x512xf32, #tpu.memory_space<vmem>>, %arg4: memref<512x512xbf16, #tpu.memory_space<vmem>>, %arg5: memref<1x512xf32, #tpu.memory_space<vmem>>, %arg6: memref<64x512xbf16, #tpu.memory_space<vmem>>) attributes {dimension_semantics = [#tpu.dimension_semantics<parallel>], iteration_bounds = array<i64: 2>, scalar_prefetch = 0 : i64, scratch_operands = 0 : i64, tpu.core_type = #tpu.core_type<tc>, window_params = [{transform_indices = @transform_0, window_bounds = array<i64: 64, 512>}, {pipeline_mode = #tpu.pipeline_mode<synchronous>, transform_indices = @transform_1, window_bounds = array<i64: 512, 512>}, {pipeline_mode = #tpu.pipeline_mode<synchronous>, transform_indices = @transform_2, window_bounds = array<i64: 1, 512>}, {pipeline_mode = #tpu.pipeline_mode<synchronous>, transform_indices = @transform_3, window_bounds = array<i64: 512, 512>}, {pipeline_mode = #tpu.pipeline_mode<synchronous>, transform_indices = @transform_4, window_bounds = array<i64: 1, 512>}, {transform_indices = @transform_5, window_bounds = array<i64: 64, 512>}]} {
    %c0 = arith.constant 0 : index
    %c0_0 = arith.constant 0 : index
    %0 = vector.load %arg1[%c0, %c0_0] : memref<64x512xf32, #tpu.memory_space<vmem>>, vector<64x512xf32>
    %1 = arith.truncf %0 : vector<64x512xf32> to vector<64x512xbf16>
    %c0_1 = arith.constant 0 : index
    %c0_2 = arith.constant 0 : index
    %2 = vector.load %arg2[%c0_1, %c0_2] : memref<512x512xbf16, #tpu.memory_space<vmem>>, vector<512x512xbf16>
    %cst = arith.constant dense<0.000000e+00> : vector<64x512xf32>
    %3 = tpu.matmul %1, %2, %cst {dimension_numbers = #tpu.dot_dimension_numbers<[1], [0], [0], [1], [0, 0, 1, 1], [], []>} : vector<64x512xbf16>, vector<512x512xbf16>, vector<64x512xf32> -> vector<64x512xf32>
    %c0_3 = arith.constant 0 : index
    %c0_4 = arith.constant 0 : index
    %4 = vector.load %arg3[%c0_3, %c0_4] : memref<1x512xf32, #tpu.memory_space<vmem>>, vector<1x512xf32>
    %5 = vector.broadcast %4 : vector<1x512xf32> to vector<64x512xf32>
    %6 = arith.addf %3, %5 : vector<64x512xf32>
    %cst_5 = arith.constant 0.000000e+00 : f32
    %7 = vector.broadcast %cst_5 : f32 to vector<64x512xf32>
    %8 = arith.maximumf %6, %7 : vector<64x512xf32>
    %9 = arith.truncf %8 : vector<64x512xf32> to vector<64x512xbf16>
    %c0_6 = arith.constant 0 : index
    %c0_7 = arith.constant 0 : index
    %10 = vector.load %arg4[%c0_6, %c0_7] : memref<512x512xbf16, #tpu.memory_space<vmem>>, vector<512x512xbf16>
    %cst_8 = arith.constant dense<0.000000e+00> : vector<64x512xf32>
    %11 = tpu.matmul %9, %10, %cst_8 {dimension_numbers = #tpu.dot_dimension_numbers<[1], [0], [0], [1], [0, 0, 1, 1], [], []>} : vector<64x512xbf16>, vector<512x512xbf16>, vector<64x512xf32> -> vector<64x512xf32>
    %c0_9 = arith.constant 0 : index
    %c0_10 = arith.constant 0 : index
    %12 = vector.load %arg5[%c0_9, %c0_10] : memref<1x512xf32, #tpu.memory_space<vmem>>, vector<1x512xf32>
    %13 = vector.broadcast %12 : vector<1x512xf32> to vector<64x512xf32>
    %14 = arith.addf %11, %13 : vector<64x512xf32>
    %15 = arith.addf %14, %0 : vector<64x512xf32>
    %cst_11 = arith.constant 0.000000e+00 : f32
    %16 = vector.broadcast %cst_11 : f32 to vector<64x512xf32>
    %17 = arith.maximumf %15, %16 : vector<64x512xf32>
    %18 = arith.truncf %17 : vector<64x512xf32> to vector<64x512xbf16>
    %c0_12 = arith.constant 0 : index
    %c0_13 = arith.constant 0 : index
    %19 = vector.load %arg6[%c0_12, %c0_13] : memref<64x512xbf16, #tpu.memory_space<vmem>>, vector<64x512xbf16>
    tpu.vector_store %arg6[%c0_12, %c0_13], %18 {strides = array<i32>} : memref<64x512xbf16, #tpu.memory_space<vmem>>, vector<64x512xbf16>,
    return
  }
  func.func @transform_0(%arg0: i32) -> (i32, i32) {
    %c0_i32 = arith.constant 0 : i32
    %c0_i32_0 = arith.constant 0 : i32
    return %arg0, %c0_i32 : i32, i32
  }
  func.func @transform_1(%arg0: i32) -> (i32, i32) {
    %c0_i32 = arith.constant 0 : i32
    %c0_i32_0 = arith.constant 0 : i32
    %c0_i32_1 = arith.constant 0 : i32
    return %c0_i32, %c0_i32_0 : i32, i32
  }
  func.func @transform_2(%arg0: i32) -> (i32, i32) {
    %c0_i32 = arith.constant 0 : i32
    %c0_i32_0 = arith.constant 0 : i32
    %c0_i32_1 = arith.constant 0 : i32
    return %c0_i32, %c0_i32_0 : i32, i32
  }
  func.func @transform_3(%arg0: i32) -> (i32, i32) {
    %c0_i32 = arith.constant 0 : i32
    %c0_i32_0 = arith.constant 0 : i32
    %c0_i32_1 = arith.constant 0 : i32
    return %c0_i32, %c0_i32_0 : i32, i32
  }
  func.func @transform_4(%arg0: i32) -> (i32, i32) {
    %c0_i32 = arith.constant 0 : i32
    %c0_i32_0 = arith.constant 0 : i32
    %c0_i32_1 = arith.constant 0 : i32
    return %c0_i32, %c0_i32_0 : i32, i32
  }
  func.func @transform_5(%arg0: i32) -> (i32, i32) {
    %c0_i32 = arith.constant 0 : i32
    %c0_i32_0 = arith.constant 0 : i32
    return %arg0, %c0_i32 : i32, i32
  }
}

</mosaic_0001>

<llo_original>
// kernel: tpu_custom_call.1
$region0: #{tpu_custom_call.1}
  #allocation0 [shape = 'u32[]', space=smem, size = 0x4, offset = 0x4, fixed_abs, tag = 'smem constant byte address 0x4 - core index']
  #allocation1 [shape = 'u32[144,128]{1,0:T(1,128)}', space=vmem, size = 0x12000, scoped, tag = 'internal scratch']
  %s0 = inlined_call_operand.hbm [shape: f32[128,512], index: 0, kind: input, shape index: {}]
  %s1 = inlined_call_operand.hbm [shape: bf16[512,512], index: 1, kind: input, shape index: {}]
  %s2 = inlined_call_operand.hbm [shape: f32[1,512], index: 2, kind: input, shape index: {}]
  %s3 = inlined_call_operand.hbm [shape: bf16[512,512], index: 3, kind: input, shape index: {}]
  %s4 = inlined_call_operand.vmem [shape: f32[1,512], index: 4, kind: input, shape index: {}]
  %s5 = inlined_call_operand.hbm [shape: bf16[128,512], index: 5, kind: output, shape index: {}]
  %s6 = sld [smem:[#allocation0]]
  $region69: #{tpu_custom_call.1} parent=0
    _
  %s8 = ssub.s32 1, %s6
  %s9 = scalar_select 0, %s8, %s6
  $region1: #{tpu_custom_call.1} parent=0
    #allocation2 [shape = 'u8[262144]{0}', space=vmem, size = 0x40000, scoped, tag = 'input window, operand 0']
    #allocation3 [shape = 's32[2]{0}', space=sflag, size = 0x8, scoped, tag = 'scoped memory for tpu_custom_call.1']
    #allocation4 [shape = 's32[2]{0}', space=sflag, size = 0x8, scoped, tag = 'scoped memory for tpu_custom_call.1']
    #allocation5 [shape = 'u8[524288]{0}', space=vmem, size = 0x80000, scoped, tag = 'input window, operand 1, single buffered']
    #allocation6 [shape = 's32[1]{0}', space=sflag, size = 0x4, scoped, tag = 'scoped memory for tpu_custom_call.1']
    #allocation7 [shape = 'u8[2048]{0}', space=vmem, size = 0x800, scoped, tag = 'input window, operand 2, single buffered']
    #allocation8 [shape = 'u8[524288]{0}', space=vmem, size = 0x80000, scoped, tag = 'input window, operand 3, single buffered']
    #allocation9 [shape = 's32[1]{0}', space=sflag, size = 0x4, scoped, tag = 'scoped memory for tpu_custom_call.1']
    #allocation10 [shape = 'u8[131072]{0}', space=vmem, size = 0x20000, scoped, tag = 'output window, operand 0']
    %10 = vsyncpa [#allocation3], 0
    %s11 = scalar_lea.sflag [#allocation3], 1
    %12 = vsyncpa %s11, 0
    %13 = vsyncpa [#allocation6], 0
    %14 = vsyncpa [#allocation9], 0
    %15 = vsyncpa [#allocation4], 0
    %s16 = scalar_lea.sflag [#allocation4], 1
    %17 = vsyncpa %s16, 0
    loop: start=0, step=1, limit=4
    $region2: #{tpu_custom_call.1} parent=1 // loop_pre_header
      _
    $region3: #{tpu_custom_call.1} parent=1 // loop_header
      %s19 = sphi 0, %s23
      %p20 = scmp.ge.s32.totalorder %s19, 4
      %s29 = sphi 0, %s31
      %s32 = sphi 0, %s29
      %s33 = sphi 0, %s32
      %s49 = sphi 0, %s33
      %s53 = sphi 0, %s53
      %s55 = sphi 0, %s53
      %s56 = sphi 0, %s55
      %s70 = sphi 0, %s56
      %s74 = sphi 0, %s74
      %s76 = sphi 0, %s74
      %s77 = sphi 0, %s76
      %s91 = sphi 0, %s77
      %s95 = sphi 0, %s95
      %s97 = sphi 0, %s95
      %s98 = sphi 0, %s97
      %s112 = sphi 0, %s98
      %s116 = sphi 0, %s116
      %s118 = sphi 0, %s116
      %s119 = sphi 0, %s118
      %s133 = sphi 0, %s119
      %s139 = sphi 0, %s141
      %s142 = sphi 0, %s139
      %s143 = sphi 0, %s142
      %s159 = sphi 0, %s143
    $region4: #{tpu_custom_call.1} parent=1 // loop_header_branch
      %22 = sbr.rel (%p20) target = $region8
    $region5: #{tpu_custom_call.1} parent=1 // loop_body
      %s24 = ssub.s32 %s19, 1
      %s25 = ssub.s32 %s19, 2
      %s26 = sadd.s32 %s19, 1
      %s27 = ssub.s32 %s19, %s26
      %p28 = scmp.eq.s32.totalorder %s27, 0
      %s30 = sadd.s32 %s29, 1
      %s31 = scalar_select %p28, %s29, %s30
      %p34 = pneg %p28
      %p35 = scmp.eq.s32.totalorder %s19, 1
      %p36 = por %p34, %p35
      %p37 = scmp.ne.s32.totalorder %s29, %s32
      %p38 = scmp.eq.s32.totalorder %s19, 0
      %p39 = por %p37, %p38
      %p40 = scmp.ne.s32.totalorder %s29, %s32
      %p41 = scmp.eq.s32.totalorder %s24, 1
      %p42 = por %p40, %p41
      %p43 = scmp.ne.s32.totalorder %s32, %s33
      %p44 = scmp.eq.s32.totalorder %s24, 0
      %p45 = por %p43, %p44
      %p46 = scmp.ne.s32.totalorder %s32, %s33
      %p47 = scmp.eq.s32.totalorder %s25, 1
      %p48 = por %p46, %p47
      %p50 = scmp.ne.s32.totalorder %s33, %s49
      %p51 = scmp.eq.s32.totalorder %s25, 0
      %p52 = por %p50, %p51
      %s54 = sadd.s32 %s53, 1
      %p57 = scmp.eq.s32.totalorder %s19, 1
      %p58 = scmp.ne.s32.totalorder %s53, %s55
      %p59 = scmp.eq.s32.totalorder %s19, 0
      %p60 = por %p58, %p59
      %p61 = scmp.ne.s32.totalorder %s53, %s55
      %p62 = scmp.eq.s32.totalorder %s24, 1
      %p63 = por %p61, %p62
      %p64 = scmp.ne.s32.totalorder %s55, %s56
      %p65 = scmp.eq.s32.totalorder %s24, 0
      %p66 = por %p64, %p65
      %p67 = scmp.ne.s32.totalorder %s55, %s56
      %p68 = scmp.eq.s32.totalorder %s25, 1
      %p69 = por %p67, %p68
      %p71 = scmp.ne.s32.totalorder %s56, %s70
      %p72 = scmp.eq.s32.totalorder %s25, 0
      %p73 = por %p71, %p72
      %s75 = sadd.s32 %s74, 1
      %p78 = scmp.eq.s32.totalorder %s19, 1
      %p79 = scmp.ne.s32.totalorder %s74, %s76
      %p80 = scmp.eq.s32.totalorder %s19, 0
      %p81 = por %p79, %p80
      %p82 = scmp.ne.s32.totalorder %s74, %s76
      %p83 = scmp.eq.s32.totalorder %s24, 1
      %p84 = por %p82, %p83
      %p85 = scmp.ne.s32.totalorder %s76, %s77
      %p86 = scmp.eq.s32.totalorder %s24, 0
      %p87 = por %p85, %p86
      %p88 = scmp.ne.s32.totalorder %s76, %s77
      %p89 = scmp.eq.s32.totalorder %s25, 1
      %p90 = por %p88, %p89
      %p92 = scmp.ne.s32.totalorder %s77, %s91
      %p93 = scmp.eq.s32.totalorder %s25, 0
      %p94 = por %p92, %p93
      %s96 = sadd.s32 %s95, 1
      %p99 = scmp.eq.s32.totalorder %s19, 1
      %p100 = scmp.ne.s32.totalorder %s95, %s97
      %p101 = scmp.eq.s32.totalorder %s19, 0
      %p102 = por %p100, %p101
      %p103 = scmp.ne.s32.totalorder %s95, %s97
      %p104 = scmp.eq.s32.totalorder %s24, 1
      %p105 = por %p103, %p104
      %p106 = scmp.ne.s32.totalorder %s97, %s98
      %p107 = scmp.eq.s32.totalorder %s24, 0
      %p108 = por %p106, %p107
      %p109 = scmp.ne.s32.totalorder %s97, %s98
      %p110 = scmp.eq.s32.totalorder %s25, 1
      %p111 = por %p109, %p110
      %p113 = scmp.ne.s32.totalorder %s98, %s112
      %p114 = scmp.eq.s32.totalorder %s25, 0
      %p115 = por %p113, %p114
      %s117 = sadd.s32 %s116, 1
      %p120 = scmp.eq.s32.totalorder %s19, 1
      %p121 = scmp.ne.s32.totalorder %s116, %s118
      %p122 = scmp.eq.s32.totalorder %s19, 0
      %p123 = por %p121, %p122
      %p124 = scmp.ne.s32.totalorder %s116, %s118
      %p125 = scmp.eq.s32.totalorder %s24, 1
      %p126 = por %p124, %p125
      %p127 = scmp.ne.s32.totalorder %s118, %s119
      %p128 = scmp.eq.s32.totalorder %s24, 0
      %p129 = por %p127, %p128
      %p130 = scmp.ne.s32.totalorder %s118, %s119
      %p131 = scmp.eq.s32.totalorder %s25, 1
      %p132 = por %p130, %p131
      %p134 = scmp.ne.s32.totalorder %s119, %s133
      %p135 = scmp.eq.s32.totalorder %s25, 0
      %p136 = por %p134, %p135
      %s137 = ssub.s32 %s19, %s26
      %p138 = scmp.eq.s32.totalorder %s137, 0
      %s140 = sadd.s32 %s139, 1
      %s141 = scalar_select %p138, %s139, %s140
      %p144 = pneg %p138
      %p145 = scmp.eq.s32.totalorder %s19, 1
      %p146 = por %p144, %p145
      %p147 = scmp.ne.s32.totalorder %s139, %s142
      %p148 = scmp.eq.s32.totalorder %s19, 0
      %p149 = por %p147, %p148
      %p150 = scmp.ne.s32.totalorder %s139, %s142
      %p151 = scmp.eq.s32.totalorder %s24, 1
      %p152 = por %p150, %p151
      %p153 = scmp.ne.s32.totalorder %s142, %s143
      %p154 = scmp.eq.s32.totalorder %s24, 0
      %p155 = por %p153, %p154
      %p156 = scmp.ne.s32.totalorder %s142, %s143
      %p157 = scmp.eq.s32.totalorder %s25, 1
      %p158 = por %p156, %p157
      %p160 = scmp.ne.s32.totalorder %s143, %s159
      %p161 = scmp.eq.s32.totalorder %s25, 0
      %p162 = por %p160, %p161
      %p163 = scmp.le.s32.totalorder 1, %s19
      %p164 = scmp.lt.s32.totalorder %s19, 3
      %p165 = pnand %p163, %p164
      %p166 = pneg %p165
      // Predicated region
      $region9: #{tpu_custom_call.1} parent=5 // pred_check
        _
      $region10: #{tpu_custom_call.1} parent=5 // pred_check_branch
        %168 = sbr.rel (%p165) target = $region12
      $region11: #{tpu_custom_call.1} parent=5 // pred_region
        %s169 = ssub.s32 %s19, 1
        // Predicated region
        $region13: #{tpu_custom_call.1} parent=11 // pred_check
          %p170 = pneg %p66
        $region14: #{tpu_custom_call.1} parent=11 // pred_check_branch
          %172 = sbr.rel (%p170) target = $region16
        $region15: #{tpu_custom_call.1} parent=11 // pred_region
          %s174 = ssub.s32 16384, 16384
          %175 = vsyncadd [#allocation6], %s174
          %s176 = sshll.u32 [#allocation5], 4
          %s177 = int_to_ptr.vmem [resolvable:$true] %s176
          %182 = dma.hbm_to_vmem [thread:$0]  %s1, 16384, %s177, [#allocation6], 256, 256, 16
        $region16: #{tpu_custom_call.1} parent=11 // pred_fallthru
          _
        // Predicated region
        $region17: #{tpu_custom_call.1} parent=11 // pred_check
          %p183 = pneg %p87
        $region18: #{tpu_custom_call.1} parent=11 // pred_check_branch
          %185 = sbr.rel (%p183) target = $region20
        $region19: #{tpu_custom_call.1} parent=11 // pred_region
          %s187 = ssub.s32 64, 64
          %188 = vsyncadd [#allocation6], %s187
          %s190 = sshll.u32 [#allocation7], 4
          %s191 = int_to_ptr.vmem [resolvable:$true] %s190
          %193 = dma.hbm_to_vmem [thread:$0]  %s2, 64, %s191, [#allocation6]
        $region20: #{tpu_custom_call.1} parent=11 // pred_fallthru
          _
        // Predicated region
        $region21: #{tpu_custom_call.1} parent=11 // pred_check
          %p194 = pneg %p108
        $region22: #{tpu_custom_call.1} parent=11 // pred_check_branch
          %196 = sbr.rel (%p194) target = $region24
        $region23: #{tpu_custom_call.1} parent=11 // pred_region
          %s198 = ssub.s32 16384, 16384
          %199 = vsyncadd [#allocation9], %s198
          %s200 = sshll.u32 [#allocation8], 4
          %s201 = int_to_ptr.vmem [resolvable:$true] %s200
          %206 = dma.hbm_to_vmem [thread:$0]  %s3, 16384, %s201, [#allocation9], 256, 256, 16
        $region24: #{tpu_custom_call.1} parent=11 // pred_fallthru
          _
        // Predicated region
        $region25: #{tpu_custom_call.1} parent=11 // pred_check
          %p207 = pneg %p129
        $region26: #{tpu_custom_call.1} parent=11 // pred_check_branch
          %209 = sbr.rel (%p207) target = $region28
        $region27: #{tpu_custom_call.1} parent=11 // pred_region
          _
        $region28: #{tpu_custom_call.1} parent=11 // pred_fallthru
          _
      $region12: #{tpu_custom_call.1} parent=5 // pred_fallthru
        _
      %p210 = scmp.lt.s32.totalorder %s19, 2
      // Predicated region
      $region29: #{tpu_custom_call.1} parent=5 // pred_check
        %p211 = pneg %p210
      $region30: #{tpu_custom_call.1} parent=5 // pred_check_branch
        %213 = sbr.rel (%p211) target = $region32
      $region31: #{tpu_custom_call.1} parent=5 // pred_region
        // Predicated region
        $region33: #{tpu_custom_call.1} parent=31 // pred_check
          %p214 = pneg %p39
        $region34: #{tpu_custom_call.1} parent=31 // pred_check_branch
          %216 = sbr.rel (%p214) target = $region36
        $region35: #{tpu_custom_call.1} parent=31 // pred_region
          %s217 = sand.u32 %s29, 1
          %s218 = scalar_lea.sflag [#allocation3], %s217
          %s219 = sand.u32 %s29, 1
          %s220 = smul.addr %s219, 256
          %s221 = scalar_lea.vmem [#allocation2], %s220
          %s222 = smul.u32 8, %s19
          %s224 = ssub.s32 4096, 4096
          %225 = vsyncadd %s218, %s224
          %s226 = smul.addr %s222, 4
          %s227 = smul.addr %s226, 128
          %s228 = scalar_lea.hbm %s0, %s227
          %s229 = sshll.u32 %s221, 4
          %s230 = int_to_ptr.vmem [resolvable:$true] %s229
          %235 = dma.hbm_to_vmem [thread:$0]  %s228, 4096, %s230, %s218, 512, 512, 32
        $region36: #{tpu_custom_call.1} parent=31 // pred_fallthru
          _
      $region32: #{tpu_custom_call.1} parent=5 // pred_fallthru
        _
      %p236 = scmp.le.s32.totalorder 1, %s19
      %p237 = scmp.lt.s32.totalorder %s19, 3
      %p238 = pnand %p236, %p237
      %p239 = pneg %p238
      // Predicated region
      $region37: #{tpu_custom_call.1} parent=5 // pred_check
        _
      $region38: #{tpu_custom_call.1} parent=5 // pred_check_branch
        %241 = sbr.rel (%p238) target = $region40
      $region39: #{tpu_custom_call.1} parent=5 // pred_region
        %s242 = ssub.s32 %s19, 1
        %s243 = sand.u32 %s32, 1
        %s244 = scalar_lea.sflag [#allocation3], %s243
        %s245 = sand.u32 %s32, 1
        %s246 = smul.addr %s245, 256
        %s247 = scalar_lea.vmem [#allocation2], %s246
        // Predicated region
        $region41: #{tpu_custom_call.1} parent=39 // pred_check
          %p248 = pneg %p45
        $region42: #{tpu_custom_call.1} parent=39 // pred_check_branch
          %250 = sbr.rel (%p248) target = $region44
        $region43: #{tpu_custom_call.1} parent=39 // pred_region
          %251 = dma.done %s244, 4096
        $region44: #{tpu_custom_call.1} parent=39 // pred_fallthru
          _
        // Predicated region
        $region45: #{tpu_custom_call.1} parent=39 // pred_check
          %p252 = pneg %p66
        $region46: #{tpu_custom_call.1} parent=39 // pred_check_branch
          %254 = sbr.rel (%p252) target = $region48
        $region47: #{tpu_custom_call.1} parent=39 // pred_region
          %255 = dma.done [#allocation6], 16384
        $region48: #{tpu_custom_call.1} parent=39 // pred_fallthru
          _
        // Predicated region
        $region49: #{tpu_custom_call.1} parent=39 // pred_check
          %p256 = pneg %p87
        $region50: #{tpu_custom_call.1} parent=39 // pred_check_branch
          %258 = sbr.rel (%p256) target = $region52
        $region51: #{tpu_custom_call.1} parent=39 // pred_region
          %259 = dma.done [#allocation6], 64
        $region52: #{tpu_custom_call.1} parent=39 // pred_fallthru
          _
        // Predicated region
        $region53: #{tpu_custom_call.1} parent=39 // pred_check
          %p260 = pneg %p108
        $region54: #{tpu_custom_call.1} parent=39 // pred_check_branch
          %262 = sbr.rel (%p260) target = $region56
        $region55: #{tpu_custom_call.1} parent=39 // pred_region
          %263 = dma.done [#allocation9], 16384
        $region56: #{tpu_custom_call.1} parent=39 // pred_fallthru
          _
        %s264 = sand.u32 %s32, 1
        %s265 = scalar_lea.sflag [#allocation3], %s264
        %s266 = sand.u32 %s32, 1
        %s267 = smul.addr %s266, 256
        %s268 = scalar_lea.vmem [#allocation2], %s267
        %p269 = pneg %p45
        %p270 = pneg %p42
        %p271 = pneg %p66
        %p272 = pneg %p63
        %p273 = pneg %p87
        %p274 = pneg %p84
        %p275 = pneg %p108
        %p276 = pneg %p105
        %p277 = pneg %p129
        %p278 = pneg %p126
        %p279 = pneg %p155
        %p280 = pneg %p152
        %s281 = sand.u32 %s142, 1
        %s282 = scalar_lea.sflag [#allocation4], %s281
        %s283 = sand.u32 %s142, 1
        %s284 = smul.addr %s283, 128
        %s285 = scalar_lea.vmem [#allocation10], %s284
        %s286 = smul.u32 8, %s24
        %s287 = smul.u32 8, %s24
        %v288 = vld [vmem:[%s247] sm:$0xff]
        %v289 = vld [vmem:[%s247 + $0x8] sm:$0xff]
        %v290 = vld [vmem:[%s247 + $0x10] sm:$0xff]
        %v291 = vld [vmem:[%s247 + $0x18] sm:$0xff]
        %v292 = vld [vmem:[%s247 + $0x20] sm:$0xff]
        %v293 = vld [vmem:[%s247 + $0x28] sm:$0xff]
        %v294 = vld [vmem:[%s247 + $0x30] sm:$0xff]
        %v295 = vld [vmem:[%s247 + $0x38] sm:$0xff]
        %v296 = vld [vmem:[%s247 + $0x40] sm:$0xff]
        %v297 = vld [vmem:[%s247 + $0x48] sm:$0xff]
        %v298 = vld [vmem:[%s247 + $0x50] sm:$0xff]
        %v299 = vld [vmem:[%s247 + $0x58] sm:$0xff]
        %v300 = vld [vmem:[%s247 + $0x60] sm:$0xff]
        %v301 = vld [vmem:[%s247 + $0x68] sm:$0xff]
        %v302 = vld [vmem:[%s247 + $0x70] sm:$0xff]
        %v303 = vld [vmem:[%s247 + $0x78] sm:$0xff]
        %v304 = vld [vmem:[%s247 + $0x80] sm:$0xff]
        %v305 = vld [vmem:[%s247 + $0x88] sm:$0xff]
        %v306 = vld [vmem:[%s247 + $0x90] sm:$0xff]
        %v307 = vld [vmem:[%s247 + $0x98] sm:$0xff]
        %v308 = vld [vmem:[%s247 + $0xa0] sm:$0xff]
        %v309 = vld [vmem:[%s247 + $0xa8] sm:$0xff]
        %v310 = vld [vmem:[%s247 + $0xb0] sm:$0xff]
        %v311 = vld [vmem:[%s247 + $0xb8] sm:$0xff]
        %v312 = vld [vmem:[%s247 + $0xc0] sm:$0xff]
        %v313 = vld [vmem:[%s247 + $0xc8] sm:$0xff]
        %v314 = vld [vmem:[%s247 + $0xd0] sm:$0xff]
        %v315 = vld [vmem:[%s247 + $0xd8] sm:$0xff]
        %v316 = vld [vmem:[%s247 + $0xe0] sm:$0xff]
        %v317 = vld [vmem:[%s247 + $0xe8] sm:$0xff]
        %v318 = vld [vmem:[%s247 + $0xf0] sm:$0xff]
        %v319 = vld [vmem:[%s247 + $0xf8] sm:$0xff]
        %v320 = vpack.c.bf16 %v292, %v288
        %v321 = vpack.c.bf16 %v293, %v289
        %v322 = vpack.c.bf16 %v294, %v290
        %v323 = vpack.c.bf16 %v295, %v291
        %v324 = vpack.c.bf16 %v300, %v296
        %v325 = vpack.c.bf16 %v301, %v297
        %v326 = vpack.c.bf16 %v302, %v298
        %v327 = vpack.c.bf16 %v303, %v299
        %v328 = vpack.c.bf16 %v308, %v304
        %v329 = vpack.c.bf16 %v309, %v305
        %v330 = vpack.c.bf16 %v310, %v306
        %v331 = vpack.c.bf16 %v311, %v307
        %v332 = vpack.c.bf16 %v316, %v312
        %v333 = vpack.c.bf16 %v317, %v313
        %v334 = vpack.c.bf16 %v318, %v314
        %v335 = vpack.c.bf16 %v319, %v315
        %v336 = vld [vmem:[#allocation5] sm:$0xff]
        %v337 = vld [vmem:[#allocation5 + $0x8] sm:$0xff]
        %v338 = vld [vmem:[#allocation5 + $0x10] sm:$0xff]
        %v339 = vld [vmem:[#allocation5 + $0x18] sm:$0xff]
        %v340 = vld [vmem:[#allocation5 + $0x20] sm:$0xff]
        %v341 = vld [vmem:[#allocation5 + $0x28] sm:$0xff]
        %v342 = vld [vmem:[#allocation5 + $0x30] sm:$0xff]
        %v343 = vld [vmem:[#allocation5 + $0x38] sm:$0xff]
        %v344 = vld [vmem:[#allocation5 + $0x40] sm:$0xff]
        %v345 = vld [vmem:[#allocation5 + $0x48] sm:$0xff]
        %v346 = vld [vmem:[#allocation5 + $0x50] sm:$0xff]
        %v347 = vld [vmem:[#allocation5 + $0x58] sm:$0xff]
        %v348 = vld [vmem:[#allocation5 + $0x60] sm:$0xff]
        %v349 = vld [vmem:[#allocation5 + $0x68] sm:$0xff]
        %v350 = vld [vmem:[#allocation5 + $0x70] sm:$0xff]
        %v351 = vld [vmem:[#allocation5 + $0x78] sm:$0xff]
        %v352 = vld [vmem:[#allocation5 + $0x80] sm:$0xff]
        %v353 = vld [vmem:[#allocation5 + $0x88] sm:$0xff]
        %v354 = vld [vmem:[#allocation5 + $0x90] sm:$0xff]
        %v355 = vld [vmem:[#allocation5 + $0x98] sm:$0xff]
        %v356 = vld [vmem:[#allocation5 + $0xa0] sm:$0xff]
        %v357 = vld [vmem:[#allocation5 + $0xa8] sm:$0xff]
        %v358 = vld [vmem:[#allocation5 + $0xb0] sm:$0xff]
        %v359 = vld [vmem:[#allocation5 + $0xb8] sm:$0xff]
        %v360 = vld [vmem:[#allocation5 + $0xc0] sm:$0xff]
        %v361 = vld [vmem:[#allocation5 + $0xc8] sm:$0xff]
        %v362 = vld [vmem:[#allocation5 + $0xd0] sm:$0xff]
        %v363 = vld [vmem:[#allocation5 + $0xd8] sm:$0xff]
        %v364 = vld [vmem:[#allocation5 + $0xe0] sm:$0xff]
        %v365 = vld [vmem:[#allocation5 + $0xe8] sm:$0xff]
        %v366 = vld [vmem:[#allocation5 + $0xf0] sm:$0xff]
        %v367 = vld [vmem:[#allocation5 + $0xf8] sm:$0xff]
        %v368 = vld [vmem:[#allocation5 + $0x100] sm:$0xff]
        %v369 = vld [vmem:[#allocation5 + $0x108] sm:$0xff]
        %v370 = vld [vmem:[#allocation5 + $0x110] sm:$0xff]
        %v371 = vld [vmem:[#allocation5 + $0x118] sm:$0xff]
        %v372 = vld [vmem:[#allocation5 + $0x120] sm:$0xff]
        %v373 = vld [vmem:[#allocation5 + $0x128] sm:$0xff]
        %v374 = vld [vmem:[#allocation5 + $0x130] sm:$0xff]
        %v375 = vld [vmem:[#allocation5 + $0x138] sm:$0xff]
        %v376 = vld [vmem:[#allocation5 + $0x140] sm:$0xff]
        %v377 = vld [vmem:[#allocation5 + $0x148] sm:$0xff]
        %v378 = vld [vmem:[#allocation5 + $0x150] sm:$0xff]
        %v379 = vld [vmem:[#allocation5 + $0x158] sm:$0xff]
        %v380 = vld [vmem:[#allocation5 + $0x160] sm:$0xff]
        %v381 = vld [vmem:[#allocation5 + $0x168] sm:$0xff]
        %v382 = vld [vmem:[#allocation5 + $0x170] sm:$0xff]
        %v383 = vld [vmem:[#allocation5 + $0x178] sm:$0xff]
        %v384 = vld [vmem:[#allocation5 + $0x180] sm:$0xff]
        %v385 = vld [vmem:[#allocation5 + $0x188] sm:$0xff]
        %v386 = vld [vmem:[#allocation5 + $0x190] sm:$0xff]
        %v387 = vld [vmem:[#allocation5 + $0x198] sm:$0xff]
        %v388 = vld [vmem:[#allocation5 + $0x1a0] sm:$0xff]
        %v389 = vld [vmem:[#allocation5 + $0x1a8] sm:$0xff]
        %v390 = vld [vmem:[#allocation5 + $0x1b0] sm:$0xff]
        %v391 = vld [vmem:[#allocation5 + $0x1b8] sm:$0xff]
        %v392 = vld [vmem:[#allocation5 + $0x1c0] sm:$0xff]
        %v393 = vld [vmem:[#allocation5 + $0x1c8] sm:$0xff]
        %v394 = vld [vmem:[#allocation5 + $0x1d0] sm:$0xff]
        %v395 = vld [vmem:[#allocation5 + $0x1d8] sm:$0xff]
        %v396 = vld [vmem:[#allocation5 + $0x1e0] sm:$0xff]
        %v397 = vld [vmem:[#allocation5 + $0x1e8] sm:$0xff]
        %v398 = vld [vmem:[#allocation5 + $0x1f0] sm:$0xff]
        %v399 = vld [vmem:[#allocation5 + $0x1f8] sm:$0xff]
        %v400 = vld [vmem:[#allocation5 + $0x200] sm:$0xff]
        %v401 = vld [vmem:[#allocation5 + $0x208] sm:$0xff]
        %v402 = vld [vmem:[#allocation5 + $0x210] sm:$0xff]
        %v403 = vld [vmem:[#allocation5 + $0x218] sm:$0xff]
        %v404 = vld [vmem:[#allocation5 + $0x220] sm:$0xff]
        %v405 = vld [vmem:[#allocation5 + $0x228] sm:$0xff]
        %v406 = vld [vmem:[#allocation5 + $0x230] sm:$0xff]
        %v407 = vld [vmem:[#allocation5 + $0x238] sm:$0xff]
        %v408 = vld [vmem:[#allocation5 + $0x240] sm:$0xff]
        %v409 = vld [vmem:[#allocation5 + $0x248] sm:$0xff]
        %v410 = vld [vmem:[#allocation5 + $0x250] sm:$0xff]
        %v411 = vld [vmem:[#allocation5 + $0x258] sm:$0xff]
        %v412 = vld [vmem:[#allocation5 + $0x260] sm:$0xff]
        %v413 = vld [vmem:[#allocation5 + $0x268] sm:$0xff]
        %v414 = vld [vmem:[#allocation5 + $0x270] sm:$0xff]
        %v415 = vld [vmem:[#allocation5 + $0x278] sm:$0xff]
        %v416 = vld [vmem:[#allocation5 + $0x280] sm:$0xff]
        %v417 = vld [vmem:[#allocation5 + $0x288] sm:$0xff]
        %v418 = vld [vmem:[#allocation5 + $0x290] sm:$0xff]
        %v419 = vld [vmem:[#allocation5 + $0x298] sm:$0xff]
        %v420 = vld [vmem:[#allocation5 + $0x2a0] sm:$0xff]
        %v421 = vld [vmem:[#allocation5 + $0x2a8] sm:$0xff]
        %v422 = vld [vmem:[#allocation5 + $0x2b0] sm:$0xff]
        %v423 = vld [vmem:[#allocation5 + $0x2b8] sm:$0xff]
        %v424 = vld [vmem:[#allocation5 + $0x2c0] sm:$0xff]
        %v425 = vld [vmem:[#allocation5 + $0x2c8] sm:$0xff]
        %v426 = vld [vmem:[#allocation5 + $0x2d0] sm:$0xff]
        %v427 = vld [vmem:[#allocation5 + $0x2d8] sm:$0xff]
        %v428 = vld [vmem:[#allocation5 + $0x2e0] sm:$0xff]
        %v429 = vld [vmem:[#allocation5 + $0x2e8] sm:$0xff]
        %v430 = vld [vmem:[#allocation5 + $0x2f0] sm:$0xff]
        %v431 = vld [vmem:[#allocation5 + $0x2f8] sm:$0xff]
        %v432 = vld [vmem:[#allocation5 + $0x300] sm:$0xff]
        %v433 = vld [vmem:[#allocation5 + $0x308] sm:$0xff]
        %v434 = vld [vmem:[#allocation5 + $0x310] sm:$0xff]
        %v435 = vld [vmem:[#allocation5 + $0x318] sm:$0xff]
        %v436 = vld [vmem:[#allocation5 + $0x320] sm:$0xff]
        %v437 = vld [vmem:[#allocation5 + $0x328] sm:$0xff]
        %v438 = vld [vmem:[#allocation5 + $0x330] sm:$0xff]
        %v439 = vld [vmem:[#allocation5 + $0x338] sm:$0xff]
        %v440 = vld [vmem:[#allocation5 + $0x340] sm:$0xff]
        %v441 = vld [vmem:[#allocation5 + $0x348] sm:$0xff]
        %v442 = vld [vmem:[#allocation5 + $0x350] sm:$0xff]
        %v443 = vld [vmem:[#allocation5 + $0x358] sm:$0xff]
        %v444 = vld [vmem:[#allocation5 + $0x360] sm:$0xff]
        %v445 = vld [vmem:[#allocation5 + $0x368] sm:$0xff]
        %v446 = vld [vmem:[#allocation5 + $0x370] sm:$0xff]
        %v447 = vld [vmem:[#allocation5 + $0x378] sm:$0xff]
        %v448 = vld [vmem:[#allocation5 + $0x380] sm:$0xff]
        %v449 = vld [vmem:[#allocation5 + $0x388] sm:$0xff]
        %v450 = vld [vmem:[#allocation5 + $0x390] sm:$0xff]
        %v451 = vld [vmem:[#allocation5 + $0x398] sm:$0xff]
        %v452 = vld [vmem:[#allocation5 + $0x3a0] sm:$0xff]
        %v453 = vld [vmem:[#allocation5 + $0x3a8] sm:$0xff]
        %v454 = vld [vmem:[#allocation5 + $0x3b0] sm:$0xff]
        %v455 = vld [vmem:[#allocation5 + $0x3b8] sm:$0xff]
        %v456 = vld [vmem:[#allocation5 + $0x3c0] sm:$0xff]
        %v457 = vld [vmem:[#allocation5 + $0x3c8] sm:$0xff]
        %v458 = vld [vmem:[#allocation5 + $0x3d0] sm:$0xff]
        %v459 = vld [vmem:[#allocation5 + $0x3d8] sm:$0xff]
        %v460 = vld [vmem:[#allocation5 + $0x3e0] sm:$0xff]
        %v461 = vld [vmem:[#allocation5 + $0x3e8] sm:$0xff]
        %v462 = vld [vmem:[#allocation5 + $0x3f0] sm:$0xff]
        %v463 = vld [vmem:[#allocation5 + $0x3f8] sm:$0xff]
        %v464 = vld [vmem:[#allocation7] sm:$0xf]
        %v466 = vlaneseq
        %v467 = vshrl.u32 %v466, 7
        %v468 = vsub.s32 0, %v467
        %v469 = vrot.slane %v464, %v468
        %v470 = vlaneseq
        %v471 = vshrl.u32 %v470, 7
        %v472 = vsub.s32 1, %v471
        %v473 = vrot.slane %v464, %v472
        %v474 = vlaneseq
        %v475 = vshrl.u32 %v474, 7
        %v476 = vsub.s32 2, %v475
        %v477 = vrot.slane %v464, %v476
        %v478 = vlaneseq
        %v479 = vshrl.u32 %v478, 7
        %v480 = vsub.s32 3, %v479
        %v481 = vrot.slane %v464, %v480
        %v614 = vunpack.c.l.b16 %v336
        %v615 = vunpack.c.h.b16 %v336
        %v616 = vunpack.c.l.b16 %v337
        %v617 = vunpack.c.h.b16 %v337
        %v618 = vunpack.c.l.b16 %v338
        %v619 = vunpack.c.h.b16 %v338
        %v620 = vunpack.c.l.b16 %v339
        %v621 = vunpack.c.h.b16 %v339
        %v622 = vunpack.c.l.b16 %v340
        %v623 = vunpack.c.h.b16 %v340
        %v624 = vunpack.c.l.b16 %v341
        %v625 = vunpack.c.h.b16 %v341
        %v626 = vunpack.c.l.b16 %v342
        %v627 = vunpack.c.h.b16 %v342
        %v628 = vunpack.c.l.b16 %v343
        %v629 = vunpack.c.h.b16 %v343
        %v630 = vunpack.c.l.b16 %v344
        %v631 = vunpack.c.h.b16 %v344
        %v632 = vunpack.c.l.b16 %v345
        %v633 = vunpack.c.h.b16 %v345
        %v634 = vunpack.c.l.b16 %v346
        %v635 = vunpack.c.h.b16 %v346
        %v636 = vunpack.c.l.b16 %v347
        %v637 = vunpack.c.h.b16 %v347
        %v638 = vunpack.c.l.b16 %v348
        %v639 = vunpack.c.h.b16 %v348
        %v640 = vunpack.c.l.b16 %v349
        %v641 = vunpack.c.h.b16 %v349
        %v642 = vunpack.c.l.b16 %v350
        %v643 = vunpack.c.h.b16 %v350
        %v644 = vunpack.c.l.b16 %v351
        %v645 = vunpack.c.h.b16 %v351
        %v646 = vunpack.c.l.b16 %v352
        %v647 = vunpack.c.h.b16 %v352
        %v648 = vunpack.c.l.b16 %v353
        %v649 = vunpack.c.h.b16 %v353
        %v650 = vunpack.c.l.b16 %v354
        %v651 = vunpack.c.h.b16 %v354
        %v652 = vunpack.c.l.b16 %v355
        %v653 = vunpack.c.h.b16 %v355
        %v654 = vunpack.c.l.b16 %v356
        %v655 = vunpack.c.h.b16 %v356
        %v656 = vunpack.c.l.b16 %v357
        %v657 = vunpack.c.h.b16 %v357
        %v658 = vunpack.c.l.b16 %v358
        %v659 = vunpack.c.h.b16 %v358
        %v660 = vunpack.c.l.b16 %v359
        %v661 = vunpack.c.h.b16 %v359
        %v662 = vunpack.c.l.b16 %v360
        %v663 = vunpack.c.h.b16 %v360
        %v664 = vunpack.c.l.b16 %v361
        %v665 = vunpack.c.h.b16 %v361
        %v666 = vunpack.c.l.b16 %v362
        %v667 = vunpack.c.h.b16 %v362
        %v668 = vunpack.c.l.b16 %v363
        %v669 = vunpack.c.h.b16 %v363
        %v670 = vunpack.c.l.b16 %v364
        %v671 = vunpack.c.h.b16 %v364
        %v672 = vunpack.c.l.b16 %v365
        %v673 = vunpack.c.h.b16 %v365
        %v674 = vunpack.c.l.b16 %v366
        %v675 = vunpack.c.h.b16 %v366
        %v676 = vunpack.c.l.b16 %v367
        %v677 = vunpack.c.h.b16 %v367
        %v678 = vunpack.c.l.b16 %v368
        %v679 = vunpack.c.h.b16 %v368
        %v680 = vunpack.c.l.b16 %v369
        %v681 = vunpack.c.h.b16 %v369
        %v682 = vunpack.c.l.b16 %v370
        %v683 = vunpack.c.h.b16 %v370
        %v684 = vunpack.c.l.b16 %v371
        %v685 = vunpack.c.h.b16 %v371
        %v686 = vunpack.c.l.b16 %v372
        %v687 = vunpack.c.h.b16 %v372
        %v688 = vunpack.c.l.b16 %v373
        %v689 = vunpack.c.h.b16 %v373
        %v690 = vunpack.c.l.b16 %v374
        %v691 = vunpack.c.h.b16 %v374
        %v692 = vunpack.c.l.b16 %v375
        %v693 = vunpack.c.h.b16 %v375
        %v694 = vunpack.c.l.b16 %v376
        %v695 = vunpack.c.h.b16 %v376
        %v696 = vunpack.c.l.b16 %v377
        %v697 = vunpack.c.h.b16 %v377
        %v698 = vunpack.c.l.b16 %v378
        %v699 = vunpack.c.h.b16 %v378
        %v700 = vunpack.c.l.b16 %v379
        %v701 = vunpack.c.h.b16 %v379
        %v702 = vunpack.c.l.b16 %v380
        %v703 = vunpack.c.h.b16 %v380
        %v704 = vunpack.c.l.b16 %v381
        %v705 = vunpack.c.h.b16 %v381
        %v706 = vunpack.c.l.b16 %v382
        %v707 = vunpack.c.h.b16 %v382
        %v708 = vunpack.c.l.b16 %v383
        %v709 = vunpack.c.h.b16 %v383
        %v710 = vunpack.c.l.b16 %v384
        %v711 = vunpack.c.h.b16 %v384
        %v712 = vunpack.c.l.b16 %v385
        %v713 = vunpack.c.h.b16 %v385
        %v714 = vunpack.c.l.b16 %v386
        %v715 = vunpack.c.h.b16 %v386
        %v716 = vunpack.c.l.b16 %v387
        %v717 = vunpack.c.h.b16 %v387
        %v718 = vunpack.c.l.b16 %v388
        %v719 = vunpack.c.h.b16 %v388
        %v720 = vunpack.c.l.b16 %v389
        %v721 = vunpack.c.h.b16 %v389
        %v722 = vunpack.c.l.b16 %v390
        %v723 = vunpack.c.h.b16 %v390
        %v724 = vunpack.c.l.b16 %v391
        %v725 = vunpack.c.h.b16 %v391
        %v726 = vunpack.c.l.b16 %v392
        %v727 = vunpack.c.h.b16 %v392
        %v728 = vunpack.c.l.b16 %v393
        %v729 = vunpack.c.h.b16 %v393
        %v730 = vunpack.c.l.b16 %v394
        %v731 = vunpack.c.h.b16 %v394
        %v732 = vunpack.c.l.b16 %v395
        %v733 = vunpack.c.h.b16 %v395
        %v734 = vunpack.c.l.b16 %v396
        %v735 = vunpack.c.h.b16 %v396
        %v736 = vunpack.c.l.b16 %v397
        %v737 = vunpack.c.h.b16 %v397
        %v738 = vunpack.c.l.b16 %v398
        %v739 = vunpack.c.h.b16 %v398
        %v740 = vunpack.c.l.b16 %v399
        %v741 = vunpack.c.h.b16 %v399
        %v742 = vunpack.c.l.b16 %v400
        %v743 = vunpack.c.h.b16 %v400
        %v744 = vunpack.c.l.b16 %v401
        %v745 = vunpack.c.h.b16 %v401
        %v746 = vunpack.c.l.b16 %v402
        %v747 = vunpack.c.h.b16 %v402
        %v748 = vunpack.c.l.b16 %v403
        %v749 = vunpack.c.h.b16 %v403
        %v750 = vunpack.c.l.b16 %v404
        %v751 = vunpack.c.h.b16 %v404
        %v752 = vunpack.c.l.b16 %v405
        %v753 = vunpack.c.h.b16 %v405
        %v754 = vunpack.c.l.b16 %v406
        %v755 = vunpack.c.h.b16 %v406
        %v756 = vunpack.c.l.b16 %v407
        %v757 = vunpack.c.h.b16 %v407
        %v758 = vunpack.c.l.b16 %v408
        %v759 = vunpack.c.h.b16 %v408
        %v760 = vunpack.c.l.b16 %v409
        %v761 = vunpack.c.h.b16 %v409
        %v762 = vunpack.c.l.b16 %v410
        %v763 = vunpack.c.h.b16 %v410
        %v764 = vunpack.c.l.b16 %v411
        %v765 = vunpack.c.h.b16 %v411
        %v766 = vunpack.c.l.b16 %v412
        %v767 = vunpack.c.h.b16 %v412
        %v768 = vunpack.c.l.b16 %v413
        %v769 = vunpack.c.h.b16 %v413
        %v770 = vunpack.c.l.b16 %v414
        %v771 = vunpack.c.h.b16 %v414
        %v772 = vunpack.c.l.b16 %v415
        %v773 = vunpack.c.h.b16 %v415
        %v774 = vunpack.c.l.b16 %v416
        %v775 = vunpack.c.h.b16 %v416
        %v776 = vunpack.c.l.b16 %v417
        %v777 = vunpack.c.h.b16 %v417
        %v778 = vunpack.c.l.b16 %v418
        %v779 = vunpack.c.h.b16 %v418
        %v780 = vunpack.c.l.b16 %v419
        %v781 = vunpack.c.h.b16 %v419
        %v782 = vunpack.c.l.b16 %v420
        %v783 = vunpack.c.h.b16 %v420
        %v784 = vunpack.c.l.b16 %v421
        %v785 = vunpack.c.h.b16 %v421
        %v786 = vunpack.c.l.b16 %v422
        %v787 = vunpack.c.h.b16 %v422
        %v788 = vunpack.c.l.b16 %v423
        %v789 = vunpack.c.h.b16 %v423
        %v790 = vunpack.c.l.b16 %v424
        %v791 = vunpack.c.h.b16 %v424
        %v792 = vunpack.c.l.b16 %v425
        %v793 = vunpack.c.h.b16 %v425
        %v794 = vunpack.c.l.b16 %v426
        %v795 = vunpack.c.h.b16 %v426
        %v796 = vunpack.c.l.b16 %v427
        %v797 = vunpack.c.h.b16 %v427
        %v798 = vunpack.c.l.b16 %v428
        %v799 = vunpack.c.h.b16 %v428
        %v800 = vunpack.c.l.b16 %v429
        %v801 = vunpack.c.h.b16 %v429
        %v802 = vunpack.c.l.b16 %v430
        %v803 = vunpack.c.h.b16 %v430
        %v804 = vunpack.c.l.b16 %v431
        %v805 = vunpack.c.h.b16 %v431
        %v806 = vunpack.c.l.b16 %v432
        %v807 = vunpack.c.h.b16 %v432
        %v808 = vunpack.c.l.b16 %v433
        %v809 = vunpack.c.h.b16 %v433
        %v810 = vunpack.c.l.b16 %v434
        %v811 = vunpack.c.h.b16 %v434
        %v812 = vunpack.c.l.b16 %v435
        %v813 = vunpack.c.h.b16 %v435
        %v814 = vunpack.c.l.b16 %v436
        %v815 = vunpack.c.h.b16 %v436
        %v816 = vunpack.c.l.b16 %v437
        %v817 = vunpack.c.h.b16 %v437
        %v818 = vunpack.c.l.b16 %v438
        %v819 = vunpack.c.h.b16 %v438
        %v820 = vunpack.c.l.b16 %v439
        %v821 = vunpack.c.h.b16 %v439
        %v822 = vunpack.c.l.b16 %v440
        %v823 = vunpack.c.h.b16 %v440
        %v824 = vunpack.c.l.b16 %v441
        %v825 = vunpack.c.h.b16 %v441
        %v826 = vunpack.c.l.b16 %v442
        %v827 = vunpack.c.h.b16 %v442
        %v828 = vunpack.c.l.b16 %v443
        %v829 = vunpack.c.h.b16 %v443
        %v830 = vunpack.c.l.b16 %v444
        %v831 = vunpack.c.h.b16 %v444
        %v832 = vunpack.c.l.b16 %v445
        %v833 = vunpack.c.h.b16 %v445
        %v834 = vunpack.c.l.b16 %v446
        %v835 = vunpack.c.h.b16 %v446
        %v836 = vunpack.c.l.b16 %v447
        %v837 = vunpack.c.h.b16 %v447
        %v838 = vunpack.c.l.b16 %v448
        %v839 = vunpack.c.h.b16 %v448
        %v840 = vunpack.c.l.b16 %v449
        %v841 = vunpack.c.h.b16 %v449
        %v842 = vunpack.c.l.b16 %v450
        %v843 = vunpack.c.h.b16 %v450
        %v844 = vunpack.c.l.b16 %v451
        %v845 = vunpack.c.h.b16 %v451
        %v846 = vunpack.c.l.b16 %v452
        %v847 = vunpack.c.h.b16 %v452
        %v848 = vunpack.c.l.b16 %v453
        %v849 = vunpack.c.h.b16 %v453
        %v850 = vunpack.c.l.b16 %v454
        %v851 = vunpack.c.h.b16 %v454
        %v852 = vunpack.c.l.b16 %v455
        %v853 = vunpack.c.h.b16 %v455
        %v854 = vunpack.c.l.b16 %v456
        %v855 = vunpack.c.h.b16 %v456
        %v856 = vunpack.c.l.b16 %v457
        %v857 = vunpack.c.h.b16 %v457
        %v858 = vunpack.c.l.b16 %v458
        %v859 = vunpack.c.h.b16 %v458
        %v860 = vunpack.c.l.b16 %v459
        %v861 = vunpack.c.h.b16 %v459
        %v862 = vunpack.c.l.b16 %v460
        %v863 = vunpack.c.h.b16 %v460
        %v864 = vunpack.c.l.b16 %v461
        %v865 = vunpack.c.h.b16 %v461
        %v866 = vunpack.c.l.b16 %v462
        %v867 = vunpack.c.h.b16 %v462
        %v868 = vunpack.c.l.b16 %v463
        %v869 = vunpack.c.h.b16 %v463
        %v870 = vpack.c.b16 %v618, %v614
        %v871 = vpack.c.b16 %v619, %v615
        %v872 = vpack.c.b16 %v620, %v616
        %v873 = vpack.c.b16 %v621, %v617
        %v874 = vpack.c.b16 %v626, %v622
        %v875 = vpack.c.b16 %v627, %v623
        %v876 = vpack.c.b16 %v628, %v624
        %v877 = vpack.c.b16 %v629, %v625
        %v878 = vpack.c.b16 %v634, %v630
        %v879 = vpack.c.b16 %v635, %v631
        %v880 = vpack.c.b16 %v636, %v632
        %v881 = vpack.c.b16 %v637, %v633
        %v882 = vpack.c.b16 %v642, %v638
        %v883 = vpack.c.b16 %v643, %v639
        %v884 = vpack.c.b16 %v644, %v640
        %v885 = vpack.c.b16 %v645, %v641
        %v886 = vpack.c.b16 %v650, %v646
        %v887 = vpack.c.b16 %v651, %v647
        %v888 = vpack.c.b16 %v652, %v648
        %v889 = vpack.c.b16 %v653, %v649
        %v890 = vpack.c.b16 %v658, %v654
        %v891 = vpack.c.b16 %v659, %v655
        %v892 = vpack.c.b16 %v660, %v656
        %v893 = vpack.c.b16 %v661, %v657
        %v894 = vpack.c.b16 %v666, %v662
        %v895 = vpack.c.b16 %v667, %v663
        %v896 = vpack.c.b16 %v668, %v664
        %v897 = vpack.c.b16 %v669, %v665
        %v898 = vpack.c.b16 %v674, %v670
        %v899 = vpack.c.b16 %v675, %v671
        %v900 = vpack.c.b16 %v676, %v672
        %v901 = vpack.c.b16 %v677, %v673
        %v902 = vpack.c.b16 %v682, %v678
        %v903 = vpack.c.b16 %v683, %v679
        %v904 = vpack.c.b16 %v684, %v680
        %v905 = vpack.c.b16 %v685, %v681
        %v906 = vpack.c.b16 %v690, %v686
        %v907 = vpack.c.b16 %v691, %v687
        %v908 = vpack.c.b16 %v692, %v688
        %v909 = vpack.c.b16 %v693, %v689
        %v910 = vpack.c.b16 %v698, %v694
        %v911 = vpack.c.b16 %v699, %v695
        %v912 = vpack.c.b16 %v700, %v696
        %v913 = vpack.c.b16 %v701, %v697
        %v914 = vpack.c.b16 %v706, %v702
        %v915 = vpack.c.b16 %v707, %v703
        %v916 = vpack.c.b16 %v708, %v704
        %v917 = vpack.c.b16 %v709, %v705
        %v918 = vpack.c.b16 %v714, %v710
        %v919 = vpack.c.b16 %v715, %v711
        %v920 = vpack.c.b16 %v716, %v712
        %v921 = vpack.c.b16 %v717, %v713
        %v922 = vpack.c.b16 %v722, %v718
        %v923 = vpack.c.b16 %v723, %v719
        %v924 = vpack.c.b16 %v724, %v720
        %v925 = vpack.c.b16 %v725, %v721
        %v926 = vpack.c.b16 %v730, %v726
        %v927 = vpack.c.b16 %v731, %v727
        %v928 = vpack.c.b16 %v732, %v728
        %v929 = vpack.c.b16 %v733, %v729
        %v930 = vpack.c.b16 %v738, %v734
        %v931 = vpack.c.b16 %v739, %v735
        %v932 = vpack.c.b16 %v740, %v736
        %v933 = vpack.c.b16 %v741, %v737
        %v934 = vpack.c.b16 %v746, %v742
        %v935 = vpack.c.b16 %v747, %v743
        %v936 = vpack.c.b16 %v748, %v744
        %v937 = vpack.c.b16 %v749, %v745
        %v938 = vpack.c.b16 %v754, %v750
        %v939 = vpack.c.b16 %v755, %v751
        %v940 = vpack.c.b16 %v756, %v752
        %v941 = vpack.c.b16 %v757, %v753
        %v942 = vpack.c.b16 %v762, %v758
        %v943 = vpack.c.b16 %v763, %v759
        %v944 = vpack.c.b16 %v764, %v760
        %v945 = vpack.c.b16 %v765, %v761
        %v946 = vpack.c.b16 %v770, %v766
        %v947 = vpack.c.b16 %v771, %v767
        %v948 = vpack.c.b16 %v772, %v768
        %v949 = vpack.c.b16 %v773, %v769
        %v950 = vpack.c.b16 %v778, %v774
        %v951 = vpack.c.b16 %v779, %v775
        %v952 = vpack.c.b16 %v780, %v776
        %v953 = vpack.c.b16 %v781, %v777
        %v954 = vpack.c.b16 %v786, %v782
        %v955 = vpack.c.b16 %v787, %v783
        %v956 = vpack.c.b16 %v788, %v784
        %v957 = vpack.c.b16 %v789, %v785
        %v958 = vpack.c.b16 %v794, %v790
        %v959 = vpack.c.b16 %v795, %v791
        %v960 = vpack.c.b16 %v796, %v792
        %v961 = vpack.c.b16 %v797, %v793
        %v962 = vpack.c.b16 %v802, %v798
        %v963 = vpack.c.b16 %v803, %v799
        %v964 = vpack.c.b16 %v804, %v800
        %v965 = vpack.c.b16 %v805, %v801
        %v966 = vpack.c.b16 %v810, %v806
        %v967 = vpack.c.b16 %v811, %v807
        %v968 = vpack.c.b16 %v812, %v808
        %v969 = vpack.c.b16 %v813, %v809
        %v970 = vpack.c.b16 %v818, %v814
        %v971 = vpack.c.b16 %v819, %v815
        %v972 = vpack.c.b16 %v820, %v816
        %v973 = vpack.c.b16 %v821, %v817
        %v974 = vpack.c.b16 %v826, %v822
        %v975 = vpack.c.b16 %v827, %v823
        %v976 = vpack.c.b16 %v828, %v824
        %v977 = vpack.c.b16 %v829, %v825
        %v978 = vpack.c.b16 %v834, %v830
        %v979 = vpack.c.b16 %v835, %v831
        %v980 = vpack.c.b16 %v836, %v832
        %v981 = vpack.c.b16 %v837, %v833
        %v982 = vpack.c.b16 %v842, %v838
        %v983 = vpack.c.b16 %v843, %v839
        %v984 = vpack.c.b16 %v844, %v840
        %v985 = vpack.c.b16 %v845, %v841
        %v986 = vpack.c.b16 %v850, %v846
        %v987 = vpack.c.b16 %v851, %v847
        %v988 = vpack.c.b16 %v852, %v848
        %v989 = vpack.c.b16 %v853, %v849
        %v990 = vpack.c.b16 %v858, %v854
        %v991 = vpack.c.b16 %v859, %v855
        %v992 = vpack.c.b16 %v860, %v856
        %v993 = vpack.c.b16 %v861, %v857
        %v994 = vpack.c.b16 %v866, %v862
        %v995 = vpack.c.b16 %v867, %v863
        %v996 = vpack.c.b16 %v868, %v864
        %v997 = vpack.c.b16 %v869, %v865
        %1126 = vmatprep.subr.bf16.mxu0 %v899
        %1127 = vmatpush1.bf16.msra.mxu0 %v898
        %1128 = vmatprep.subr.bf16.mxu0 %v895
        %1129 = vmatpush1.bf16.msra.mxu0 %v894
        %1130 = vmatprep.subr.bf16.mxu0 %v891
        %1131 = vmatpush1.bf16.msra.mxu0 %v890
        %1132 = vmatprep.subr.bf16.mxu0 %v887
        %1133 = vmatpush1.bf16.msra.mxu0 %v886
        %1134 = vmatprep.subr.bf16.mxu0 %v883
        %1135 = vmatpush1.bf16.msra.mxu0 %v882
        %1136 = vmatprep.subr.bf16.mxu0 %v879
        %1137 = vmatpush1.bf16.msra.mxu0 %v878
        %1138 = vmatprep.subr.bf16.mxu0 %v875
        %1139 = vmatpush1.bf16.msra.mxu0 %v874
        %1140 = vmatprep.subr.bf16.mxu0 %v871
        %1141 = vmatpush1.bf16.msra.mxu0 %v870
        %1142 = vmatprep.subr.bf16.mxu0 %v931
        %1143 = vmatpush2.bf16.msra.mxu0 %v930
        %1144 = vmatprep.subr.bf16.mxu0 %v927
        %1145 = vmatpush2.bf16.msra.mxu0 %v926
        %1146 = vmatprep.subr.bf16.mxu0 %v923
        %1147 = vmatpush2.bf16.msra.mxu0 %v922
        %1148 = vmatprep.subr.bf16.mxu0 %v919
        %1149 = vmatpush2.bf16.msra.mxu0 %v918
        %1150 = vmatprep.subr.bf16.mxu0 %v915
        %1151 = vmatpush2.bf16.msra.mxu0 %v914
        %1152 = vmatprep.subr.bf16.mxu0 %v911
        %1153 = vmatpush2.bf16.msra.mxu0 %v910
        %1154 = vmatprep.subr.bf16.mxu0 %v907
        %1155 = vmatpush2.bf16.msra.mxu0 %v906
        %1156 = vmatprep.subr.bf16.mxu0 %v903
        %1157 = vmatpush2.bf16.msra.mxu0 %v902
        %1158 = vmatprep.mubr.bf16.mxu0 %v321
        %1159 = vmatmul.mubr.bf16.gmra.mxu0 %v320
        %v1160 = vpop.f32.mrf.mxu0
        %v1161 = vadd.f32 %v469, %v1160
        %v1162 = vpop.f32.mrf.mxu0
        %v1163 = vadd.f32 %v473, %v1162
        %v1164 = vpop.f32.mrf.mxu0
        %v1165 = vadd.f32 %v469, %v1164
        %v1166 = vpop.f32.mrf.mxu0
        %v1167 = vadd.f32 %v473, %v1166
        %1168 = vmatprep.mubr.bf16.mxu0 %v325
        %1169 = vmatmul.mubr.bf16.gmra.mxu0 %v324
        %v1170 = vpop.f32.mrf.mxu0
        %v1171 = vadd.f32 %v469, %v1170
        %v1172 = vpop.f32.mrf.mxu0
        %v1173 = vadd.f32 %v473, %v1172
        %v1174 = vpop.f32.mrf.mxu0
        %v1175 = vadd.f32 %v469, %v1174
        %v1176 = vpop.f32.mrf.mxu0
        %v1177 = vadd.f32 %v473, %v1176
        %1178 = vmatprep.mubr.bf16.mxu0 %v329
        %1179 = vmatmul.mubr.bf16.gmra.mxu0 %v328
        %v1180 = vpop.f32.mrf.mxu0
        %v1181 = vadd.f32 %v469, %v1180
        %v1182 = vpop.f32.mrf.mxu0
        %v1183 = vadd.f32 %v473, %v1182
        %v1184 = vpop.f32.mrf.mxu0
        %v1185 = vadd.f32 %v469, %v1184
        %v1186 = vpop.f32.mrf.mxu0
        %v1187 = vadd.f32 %v473, %v1186
        %1188 = vmatprep.mubr.bf16.mxu0 %v333
        %1189 = vmatmul.mubr.bf16.gmra.mxu0 %v332
        %v1190 = vpop.f32.mrf.mxu0
        %v1191 = vadd.f32 %v469, %v1190
        %v1192 = vpop.f32.mrf.mxu0
        %v1193 = vadd.f32 %v473, %v1192
        %v1194 = vpop.f32.mrf.mxu0
        %v1195 = vadd.f32 %v469, %v1194
        %v1196 = vpop.f32.mrf.mxu0
        %v1197 = vadd.f32 %v473, %v1196
        %1198 = vdwg.mxu0
        %1199 = vmatprep.subr.bf16.mxu0 %v963
        %1200 = vmatpush1.bf16.msra.mxu0 %v962
        %1201 = vmatprep.subr.bf16.mxu0 %v959
        %1202 = vmatpush1.bf16.msra.mxu0 %v958
        %1203 = vmatprep.subr.bf16.mxu0 %v955
        %1204 = vmatpush1.bf16.msra.mxu0 %v954
        %1205 = vmatprep.subr.bf16.mxu0 %v951
        %1206 = vmatpush1.bf16.msra.mxu0 %v950
        %1207 = vmatprep.subr.bf16.mxu0 %v947
        %1208 = vmatpush1.bf16.msra.mxu0 %v946
        %1209 = vmatprep.subr.bf16.mxu0 %v943
        %1210 = vmatpush1.bf16.msra.mxu0 %v942
        %1211 = vmatprep.subr.bf16.mxu0 %v939
        %1212 = vmatpush1.bf16.msra.mxu0 %v938
        %1213 = vmatprep.subr.bf16.mxu0 %v935
        %1214 = vmatpush1.bf16.msra.mxu0 %v934
        %1215 = vmatprep.subr.bf16.mxu0 %v995
        %1216 = vmatpush2.bf16.msra.mxu0 %v994
        %1217 = vmatprep.subr.bf16.mxu0 %v991
        %1218 = vmatpush2.bf16.msra.mxu0 %v990
        %1219 = vmatprep.subr.bf16.mxu0 %v987
        %1220 = vmatpush2.bf16.msra.mxu0 %v986
        %1221 = vmatprep.subr.bf16.mxu0 %v983
        %1222 = vmatpush2.bf16.msra.mxu0 %v982
        %1223 = vmatprep.subr.bf16.mxu0 %v979
        %1224 = vmatpush2.bf16.msra.mxu0 %v978
        %1225 = vmatprep.subr.bf16.mxu0 %v975
        %1226 = vmatpush2.bf16.msra.mxu0 %v974
        %1227 = vmatprep.subr.bf16.mxu0 %v971
        %1228 = vmatpush2.bf16.msra.mxu0 %v970
        %1229 = vmatprep.subr.bf16.mxu0 %v967
        %1230 = vmatpush2.bf16.msra.mxu0 %v966
        %1231 = vmatprep.mubr.bf16.mxu0 %v323
        %1232 = vmatmul.mubr.bf16.gmra.mxu0 %v322
        %v1233 = vpop.f32.mrf.mxu0
        %v1234 = vadd.f32 %v1161, %v1233
        %v1235 = vpop.f32.mrf.mxu0
        %v1236 = vadd.f32 %v1163, %v1235
        %v1237 = vpop.f32.mrf.mxu0
        %v1238 = vadd.f32 %v1165, %v1237
        %v1239 = vpop.f32.mrf.mxu0
        %v1240 = vadd.f32 %v1167, %v1239
        %1241 = vmatprep.mubr.bf16.mxu0 %v327
        %1242 = vmatmul.mubr.bf16.gmra.mxu0 %v326
        %v1243 = vpop.f32.mrf.mxu0
        %v1244 = vadd.f32 %v1171, %v1243
        %v1245 = vpop.f32.mrf.mxu0
        %v1246 = vadd.f32 %v1173, %v1245
        %v1247 = vpop.f32.mrf.mxu0
        %v1248 = vadd.f32 %v1175, %v1247
        %v1249 = vpop.f32.mrf.mxu0
        %v1250 = vadd.f32 %v1177, %v1249
        %1251 = vmatprep.mubr.bf16.mxu0 %v331
        %1252 = vmatmul.mubr.bf16.gmra.mxu0 %v330
        %v1253 = vpop.f32.mrf.mxu0
        %v1254 = vadd.f32 %v1181, %v1253
        %v1255 = vpop.f32.mrf.mxu0
        %v1256 = vadd.f32 %v1183, %v1255
        %v1257 = vpop.f32.mrf.mxu0
        %v1258 = vadd.f32 %v1185, %v1257
        %v1259 = vpop.f32.mrf.mxu0
        %v1260 = vadd.f32 %v1187, %v1259
        %1261 = vmatprep.mubr.bf16.mxu0 %v335
        %1262 = vmatmul.mubr.bf16.gmra.mxu0 %v334
        %v1263 = vpop.f32.mrf.mxu0
        %v1264 = vadd.f32 %v1191, %v1263
        %v1265 = vpop.f32.mrf.mxu0
        %v1266 = vadd.f32 %v1193, %v1265
        %v1267 = vpop.f32.mrf.mxu0
        %v1268 = vadd.f32 %v1195, %v1267
        %v1269 = vpop.f32.mrf.mxu0
        %v1270 = vadd.f32 %v1197, %v1269
        %1271 = vdwg.mxu0
        %1272 = vmatprep.subr.bf16.mxu0 %v901
        %1273 = vmatpush1.bf16.msra.mxu0 %v900
        %1274 = vmatprep.subr.bf16.mxu0 %v897
        %1275 = vmatpush1.bf16.msra.mxu0 %v896
        %1276 = vmatprep.subr.bf16.mxu0 %v893
        %1277 = vmatpush1.bf16.msra.mxu0 %v892
        %1278 = vmatprep.subr.bf16.mxu0 %v889
        %1279 = vmatpush1.bf16.msra.mxu0 %v888
        %1280 = vmatprep.subr.bf16.mxu0 %v885
        %1281 = vmatpush1.bf16.msra.mxu0 %v884
        %1282 = vmatprep.subr.bf16.mxu0 %v881
        %1283 = vmatpush1.bf16.msra.mxu0 %v880
        %1284 = vmatprep.subr.bf16.mxu0 %v877
        %1285 = vmatpush1.bf16.msra.mxu0 %v876
        %1286 = vmatprep.subr.bf16.mxu0 %v873
        %1287 = vmatpush1.bf16.msra.mxu0 %v872
        %1288 = vmatprep.subr.bf16.mxu0 %v933
        %1289 = vmatpush2.bf16.msra.mxu0 %v932
        %1290 = vmatprep.subr.bf16.mxu0 %v929
        %1291 = vmatpush2.bf16.msra.mxu0 %v928
        %1292 = vmatprep.subr.bf16.mxu0 %v925
        %1293 = vmatpush2.bf16.msra.mxu0 %v924
        %1294 = vmatprep.subr.bf16.mxu0 %v921
        %1295 = vmatpush2.bf16.msra.mxu0 %v920
        %1296 = vmatprep.subr.bf16.mxu0 %v917
        %1297 = vmatpush2.bf16.msra.mxu0 %v916
        %1298 = vmatprep.subr.bf16.mxu0 %v913
        %1299 = vmatpush2.bf16.msra.mxu0 %v912
        %1300 = vmatprep.subr.bf16.mxu0 %v909
        %1301 = vmatpush2.bf16.msra.mxu0 %v908
        %1302 = vmatprep.subr.bf16.mxu0 %v905
        %1303 = vmatpush2.bf16.msra.mxu0 %v904
        %1304 = vmatprep.mubr.bf16.mxu0 %v321
        %1305 = vmatmul.mubr.bf16.gmra.mxu0 %v320
        %v1306 = vpop.f32.mrf.mxu0
        %v1307 = vadd.f32 %v477, %v1306
        %v1308 = vpop.f32.mrf.mxu0
        %v1309 = vadd.f32 %v481, %v1308
        %v1310 = vpop.f32.mrf.mxu0
        %v1311 = vadd.f32 %v477, %v1310
        %v1312 = vpop.f32.mrf.mxu0
        %v1313 = vadd.f32 %v481, %v1312
        %1314 = vmatprep.mubr.bf16.mxu0 %v325
        %1315 = vmatmul.mubr.bf16.gmra.mxu0 %v324
        %v1316 = vpop.f32.mrf.mxu0
        %v1317 = vadd.f32 %v477, %v1316
        %v1318 = vpop.f32.mrf.mxu0
        %v1319 = vadd.f32 %v481, %v1318
        %v1320 = vpop.f32.mrf.mxu0
        %v1321 = vadd.f32 %v477, %v1320
        %v1322 = vpop.f32.mrf.mxu0
        %v1323 = vadd.f32 %v481, %v1322
        %1324 = vmatprep.mubr.bf16.mxu0 %v329
        %1325 = vmatmul.mubr.bf16.gmra.mxu0 %v328
        %v1326 = vpop.f32.mrf.mxu0
        %v1327 = vadd.f32 %v477, %v1326
        %v1328 = vpop.f32.mrf.mxu0
        %v1329 = vadd.f32 %v481, %v1328
        %v1330 = vpop.f32.mrf.mxu0
        %v1331 = vadd.f32 %v477, %v1330
        %v1332 = vpop.f32.mrf.mxu0
        %v1333 = vadd.f32 %v481, %v1332
        %1334 = vmatprep.mubr.bf16.mxu0 %v333
        %1335 = vmatmul.mubr.bf16.gmra.mxu0 %v332
        %v1336 = vpop.f32.mrf.mxu0
        %v1337 = vadd.f32 %v477, %v1336
        %v1338 = vpop.f32.mrf.mxu0
        %v1339 = vadd.f32 %v481, %v1338
        %v1340 = vpop.f32.mrf.mxu0
        %v1341 = vadd.f32 %v477, %v1340
        %v1342 = vpop.f32.mrf.mxu0
        %v1343 = vadd.f32 %v481, %v1342
        %1344 = vdwg.mxu0
        %1345 = vmatprep.subr.bf16.mxu0 %v965
        %1346 = vmatpush1.bf16.msra.mxu0 %v964
        %1347 = vmatprep.subr.bf16.mxu0 %v961
        %1348 = vmatpush1.bf16.msra.mxu0 %v960
        %1349 = vmatprep.subr.bf16.mxu0 %v957
        %1350 = vmatpush1.bf16.msra.mxu0 %v956
        %1351 = vmatprep.subr.bf16.mxu0 %v953
        %1352 = vmatpush1.bf16.msra.mxu0 %v952
        %1353 = vmatprep.subr.bf16.mxu0 %v949
        %1354 = vmatpush1.bf16.msra.mxu0 %v948
        %1355 = vmatprep.subr.bf16.mxu0 %v945
        %1356 = vmatpush1.bf16.msra.mxu0 %v944
        %1357 = vmatprep.subr.bf16.mxu0 %v941
        %1358 = vmatpush1.bf16.msra.mxu0 %v940
        %1359 = vmatprep.subr.bf16.mxu0 %v937
        %1360 = vmatpush1.bf16.msra.mxu0 %v936
        %1361 = vmatprep.subr.bf16.mxu0 %v997
        %1362 = vmatpush2.bf16.msra.mxu0 %v996
        %1363 = vmatprep.subr.bf16.mxu0 %v993
        %1364 = vmatpush2.bf16.msra.mxu0 %v992
        %1365 = vmatprep.subr.bf16.mxu0 %v989
        %1366 = vmatpush2.bf16.msra.mxu0 %v988
        %1367 = vmatprep.subr.bf16.mxu0 %v985
        %1368 = vmatpush2.bf16.msra.mxu0 %v984
        %1369 = vmatprep.subr.bf16.mxu0 %v981
        %1370 = vmatpush2.bf16.msra.mxu0 %v980
        %1371 = vmatprep.subr.bf16.mxu0 %v977
        %1372 = vmatpush2.bf16.msra.mxu0 %v976
        %1373 = vmatprep.subr.bf16.mxu0 %v973
        %1374 = vmatpush2.bf16.msra.mxu0 %v972
        %1375 = vmatprep.subr.bf16.mxu0 %v969
        %1376 = vmatpush2.bf16.msra.mxu0 %v968
        %1377 = vmatprep.mubr.bf16.mxu0 %v323
        %1378 = vmatmul.mubr.bf16.gmra.mxu0 %v322
        %v1379 = vpop.f32.mrf.mxu0
        %v1380 = vadd.f32 %v1307, %v1379
        %v1381 = vpop.f32.mrf.mxu0
        %v1382 = vadd.f32 %v1309, %v1381
        %v1383 = vpop.f32.mrf.mxu0
        %v1384 = vadd.f32 %v1311, %v1383
        %v1385 = vpop.f32.mrf.mxu0
        %v1386 = vadd.f32 %v1313, %v1385
        %1387 = vmatprep.mubr.bf16.mxu0 %v327
        %1388 = vmatmul.mubr.bf16.gmra.mxu0 %v326
        %v1389 = vpop.f32.mrf.mxu0
        %v1390 = vadd.f32 %v1317, %v1389
        %v1391 = vpop.f32.mrf.mxu0
        %v1392 = vadd.f32 %v1319, %v1391
        %v1393 = vpop.f32.mrf.mxu0
        %v1394 = vadd.f32 %v1321, %v1393
        %v1395 = vpop.f32.mrf.mxu0
        %v1396 = vadd.f32 %v1323, %v1395
        %1397 = vmatprep.mubr.bf16.mxu0 %v331
        %1398 = vmatmul.mubr.bf16.gmra.mxu0 %v330
        %v1399 = vpop.f32.mrf.mxu0
        %v1400 = vadd.f32 %v1327, %v1399
        %v1401 = vpop.f32.mrf.mxu0
        %v1402 = vadd.f32 %v1329, %v1401
        %v1403 = vpop.f32.mrf.mxu0
        %v1404 = vadd.f32 %v1331, %v1403
        %v1405 = vpop.f32.mrf.mxu0
        %v1406 = vadd.f32 %v1333, %v1405
        %1407 = vmatprep.mubr.bf16.mxu0 %v335
        %1408 = vmatmul.mubr.bf16.gmra.mxu0 %v334
        %v1409 = vpop.f32.mrf.mxu0
        %v1410 = vadd.f32 %v1337, %v1409
        %v1411 = vpop.f32.mrf.mxu0
        %v1412 = vadd.f32 %v1339, %v1411
        %v1413 = vpop.f32.mrf.mxu0
        %v1414 = vadd.f32 %v1341, %v1413
        %v1415 = vpop.f32.mrf.mxu0
        %v1416 = vadd.f32 %v1343, %v1415
        %1417 = vdwg.mxu0
        %v1418 = vmax.f32 %v1234, 0.0
        %v1419 = vmax.f32 %v1236, 0.0
        %v1420 = vmax.f32 %v1380, 0.0
        %v1421 = vmax.f32 %v1382, 0.0
        %v1422 = vmax.f32 %v1238, 0.0
        %v1423 = vmax.f32 %v1240, 0.0
        %v1424 = vmax.f32 %v1384, 0.0
        %v1425 = vmax.f32 %v1386, 0.0
        %v1426 = vmax.f32 %v1244, 0.0
        %v1427 = vmax.f32 %v1246, 0.0
        %v1428 = vmax.f32 %v1390, 0.0
        %v1429 = vmax.f32 %v1392, 0.0
        %v1430 = vmax.f32 %v1248, 0.0
        %v1431 = vmax.f32 %v1250, 0.0
        %v1432 = vmax.f32 %v1394, 0.0
        %v1433 = vmax.f32 %v1396, 0.0
        %v1434 = vmax.f32 %v1254, 0.0
        %v1435 = vmax.f32 %v1256, 0.0
        %v1436 = vmax.f32 %v1400, 0.0
        %v1437 = vmax.f32 %v1402, 0.0
        %v1438 = vmax.f32 %v1258, 0.0
        %v1439 = vmax.f32 %v1260, 0.0
        %v1440 = vmax.f32 %v1404, 0.0
        %v1441 = vmax.f32 %v1406, 0.0
        %v1442 = vmax.f32 %v1264, 0.0
        %v1443 = vmax.f32 %v1266, 0.0
        %v1444 = vmax.f32 %v1410, 0.0
        %v1445 = vmax.f32 %v1412, 0.0
        %v1446 = vmax.f32 %v1268, 0.0
        %v1447 = vmax.f32 %v1270, 0.0
        %v1448 = vmax.f32 %v1414, 0.0
        %v1449 = vmax.f32 %v1416, 0.0
        %v1450 = vpack.c.bf16 %v1422, %v1418
        %v1451 = vpack.c.bf16 %v1423, %v1419
        %v1452 = vpack.c.bf16 %v1424, %v1420
        %v1453 = vpack.c.bf16 %v1425, %v1421
        %v1454 = vpack.c.bf16 %v1430, %v1426
        %v1455 = vpack.c.bf16 %v1431, %v1427
        %v1456 = vpack.c.bf16 %v1432, %v1428
        %v1457 = vpack.c.bf16 %v1433, %v1429
        %v1458 = vpack.c.bf16 %v1438, %v1434
        %v1459 = vpack.c.bf16 %v1439, %v1435
        %v1460 = vpack.c.bf16 %v1440, %v1436
        %v1461 = vpack.c.bf16 %v1441, %v1437
        %v1462 = vpack.c.bf16 %v1446, %v1442
        %v1463 = vpack.c.bf16 %v1447, %v1443
        %v1464 = vpack.c.bf16 %v1448, %v1444
        %v1465 = vpack.c.bf16 %v1449, %v1445
        %v1466 = vld [vmem:[#allocation8] sm:$0xff]
        %v1467 = vld [vmem:[#allocation8 + $0x8] sm:$0xff]
        %v1468 = vld [vmem:[#allocation8 + $0x10] sm:$0xff]
        %v1469 = vld [vmem:[#allocation8 + $0x18] sm:$0xff]
        %v1470 = vld [vmem:[#allocation8 + $0x20] sm:$0xff]
        %v1471 = vld [vmem:[#allocation8 + $0x28] sm:$0xff]
        %v1472 = vld [vmem:[#allocation8 + $0x30] sm:$0xff]
        %v1473 = vld [vmem:[#allocation8 + $0x38] sm:$0xff]
        %v1474 = vld [vmem:[#allocation8 + $0x40] sm:$0xff]
        %v1475 = vld [vmem:[#allocation8 + $0x48] sm:$0xff]
        %v1476 = vld [vmem:[#allocation8 + $0x50] sm:$0xff]
        %v1477 = vld [vmem:[#allocation8 + $0x58] sm:$0xff]
        %v1478 = vld [vmem:[#allocation8 + $0x60] sm:$0xff]
        %v1479 = vld [vmem:[#allocation8 + $0x68] sm:$0xff]
        %v1480 = vld [vmem:[#allocation8 + $0x70] sm:$0xff]
        %v1481 = vld [vmem:[#allocation8 + $0x78] sm:$0xff]
        %v1482 = vld [vmem:[#allocation8 + $0x80] sm:$0xff]
        %v1483 = vld [vmem:[#allocation8 + $0x88] sm:$0xff]
        %v1484 = vld [vmem:[#allocation8 + $0x90] sm:$0xff]
        %v1485 = vld [vmem:[#allocation8 + $0x98] sm:$0xff]
        %v1486 = vld [vmem:[#allocation8 + $0xa0] sm:$0xff]
        %v1487 = vld [vmem:[#allocation8 + $0xa8] sm:$0xff]
        %v1488 = vld [vmem:[#allocation8 + $0xb0] sm:$0xff]
        %v1489 = vld [vmem:[#allocation8 + $0xb8] sm:$0xff]
        %v1490 = vld [vmem:[#allocation8 + $0xc0] sm:$0xff]
        %v1491 = vld [vmem:[#allocation8 + $0xc8] sm:$0xff]
        %v1492 = vld [vmem:[#allocation8 + $0xd0] sm:$0xff]
        %v1493 = vld [vmem:[#allocation8 + $0xd8] sm:$0xff]
        %v1494 = vld [vmem:[#allocation8 + $0xe0] sm:$0xff]
        %v1495 = vld [vmem:[#allocation8 + $0xe8] sm:$0xff]
        %v1496 = vld [vmem:[#allocation8 + $0xf0] sm:$0xff]
        %v1497 = vld [vmem:[#allocation8 + $0xf8] sm:$0xff]
        %v1498 = vld [vmem:[#allocation8 + $0x100] sm:$0xff]
        %v1499 = vld [vmem:[#allocation8 + $0x108] sm:$0xff]
        %v1500 = vld [vmem:[#allocation8 + $0x110] sm:$0xff]
        %v1501 = vld [vmem:[#allocation8 + $0x118] sm:$0xff]
        %v1502 = vld [vmem:[#allocation8 + $0x120] sm:$0xff]
        %v1503 = vld [vmem:[#allocation8 + $0x128] sm:$0xff]
        %v1504 = vld [vmem:[#allocation8 + $0x130] sm:$0xff]
        %v1505 = vld [vmem:[#allocation8 + $0x138] sm:$0xff]
        %v1506 = vld [vmem:[#allocation8 + $0x140] sm:$0xff]
        %v1507 = vld [vmem:[#allocation8 + $0x148] sm:$0xff]
        %v1508 = vld [vmem:[#allocation8 + $0x150] sm:$0xff]
        %v1509 = vld [vmem:[#allocation8 + $0x158] sm:$0xff]
        %v1510 = vld [vmem:[#allocation8 + $0x160] sm:$0xff]
        %v1511 = vld [vmem:[#allocation8 + $0x168] sm:$0xff]
        %v1512 = vld [vmem:[#allocation8 + $0x170] sm:$0xff]
        %v1513 = vld [vmem:[#allocation8 + $0x178] sm:$0xff]
        %v1514 = vld [vmem:[#allocation8 + $0x180] sm:$0xff]
        %v1515 = vld [vmem:[#allocation8 + $0x188] sm:$0xff]
        %v1516 = vld [vmem:[#allocation8 + $0x190] sm:$0xff]
        %v1517 = vld [vmem:[#allocation8 + $0x198] sm:$0xff]
        %v1518 = vld [vmem:[#allocation8 + $0x1a0] sm:$0xff]
        %v1519 = vld [vmem:[#allocation8 + $0x1a8] sm:$0xff]
        %v1520 = vld [vmem:[#allocation8 + $0x1b0] sm:$0xff]
        %v1521 = vld [vmem:[#allocation8 + $0x1b8] sm:$0xff]
        %v1522 = vld [vmem:[#allocation8 + $0x1c0] sm:$0xff]
        %v1523 = vld [vmem:[#allocation8 + $0x1c8] sm:$0xff]
        %v1524 = vld [vmem:[#allocation8 + $0x1d0] sm:$0xff]
        %v1525 = vld [vmem:[#allocation8 + $0x1d8] sm:$0xff]
        %v1526 = vld [vmem:[#allocation8 + $0x1e0] sm:$0xff]
        %v1527 = vld [vmem:[#allocation8 + $0x1e8] sm:$0xff]
        %v1528 = vld [vmem:[#allocation8 + $0x1f0] sm:$0xff]
        %v1529 = vld [vmem:[#allocation8 + $0x1f8] sm:$0xff]
        %v1530 = vld [vmem:[#allocation8 + $0x200] sm:$0xff]
        %v1531 = vld [vmem:[#allocation8 + $0x208] sm:$0xff]
        %v1532 = vld [vmem:[#allocation8 + $0x210] sm:$0xff]
        %v1533 = vld [vmem:[#allocation8 + $0x218] sm:$0xff]
        %v1534 = vld [vmem:[#allocation8 + $0x220] sm:$0xff]
        %v1535 = vld [vmem:[#allocation8 + $0x228] sm:$0xff]
        %v1536 = vld [vmem:[#allocation8 + $0x230] sm:$0xff]
        %v1537 = vld [vmem:[#allocation8 + $0x238] sm:$0xff]
        %v1538 = vld [vmem:[#allocation8 + $0x240] sm:$0xff]
        %v1539 = vld [vmem:[#allocation8 + $0x248] sm:$0xff]
        %v1540 = vld [vmem:[#allocation8 + $0x250] sm:$0xff]
        %v1541 = vld [vmem:[#allocation8 + $0x258] sm:$0xff]
        %v1542 = vld [vmem:[#allocation8 + $0x260] sm:$0xff]
        %v1543 = vld [vmem:[#allocation8 + $0x268] sm:$0xff]
        %v1544 = vld [vmem:[#allocation8 + $0x270] sm:$0xff]
        %v1545 = vld [vmem:[#allocation8 + $0x278] sm:$0xff]
        %v1546 = vld [vmem:[#allocation8 + $0x280] sm:$0xff]
        %v1547 = vld [vmem:[#allocation8 + $0x288] sm:$0xff]
        %v1548 = vld [vmem:[#allocation8 + $0x290] sm:$0xff]
        %v1549 = vld [vmem:[#allocation8 + $0x298] sm:$0xff]
        %v1550 = vld [vmem:[#allocation8 + $0x2a0] sm:$0xff]
        %v1551 = vld [vmem:[#allocation8 + $0x2a8] sm:$0xff]
        %v1552 = vld [vmem:[#allocation8 + $0x2b0] sm:$0xff]
        %v1553 = vld [vmem:[#allocation8 + $0x2b8] sm:$0xff]
        %v1554 = vld [vmem:[#allocation8 + $0x2c0] sm:$0xff]
        %v1555 = vld [vmem:[#allocation8 + $0x2c8] sm:$0xff]
        %v1556 = vld [vmem:[#allocation8 + $0x2d0] sm:$0xff]
        %v1557 = vld [vmem:[#allocation8 + $0x2d8] sm:$0xff]
        %v1558 = vld [vmem:[#allocation8 + $0x2e0] sm:$0xff]
        %v1559 = vld [vmem:[#allocation8 + $0x2e8] sm:$0xff]
        %v1560 = vld [vmem:[#allocation8 + $0x2f0] sm:$0xff]
        %v1561 = vld [vmem:[#allocation8 + $0x2f8] sm:$0xff]
        %v1562 = vld [vmem:[#allocation8 + $0x300] sm:$0xff]
        %v1563 = vld [vmem:[#allocation8 + $0x308] sm:$0xff]
        %v1564 = vld [vmem:[#allocation8 + $0x310] sm:$0xff]
        %v1565 = vld [vmem:[#allocation8 + $0x318] sm:$0xff]
        %v1566 = vld [vmem:[#allocation8 + $0x320] sm:$0xff]
        %v1567 = vld [vmem:[#allocation8 + $0x328] sm:$0xff]
        %v1568 = vld [vmem:[#allocation8 + $0x330] sm:$0xff]
        %v1569 = vld [vmem:[#allocation8 + $0x338] sm:$0xff]
        %v1570 = vld [vmem:[#allocation8 + $0x340] sm:$0xff]
        %v1571 = vld [vmem:[#allocation8 + $0x348] sm:$0xff]
        %v1572 = vld [vmem:[#allocation8 + $0x350] sm:$0xff]
        %v1573 = vld [vmem:[#allocation8 + $0x358] sm:$0xff]
        %v1574 = vld [vmem:[#allocation8 + $0x360] sm:$0xff]
        %v1575 = vld [vmem:[#allocation8 + $0x368] sm:$0xff]
        %v1576 = vld [vmem:[#allocation8 + $0x370] sm:$0xff]
        %v1577 = vld [vmem:[#allocation8 + $0x378] sm:$0xff]
        %v1578 = vld [vmem:[#allocation8 + $0x380] sm:$0xff]
        %v1579 = vld [vmem:[#allocation8 + $0x388] sm:$0xff]
        %v1580 = vld [vmem:[#allocation8 + $0x390] sm:$0xff]
        %v1581 = vld [vmem:[#allocation8 + $0x398] sm:$0xff]
        %v1582 = vld [vmem:[#allocation8 + $0x3a0] sm:$0xff]
        %v1583 = vld [vmem:[#allocation8 + $0x3a8] sm:$0xff]
        %v1584 = vld [vmem:[#allocation8 + $0x3b0] sm:$0xff]
        %v1585 = vld [vmem:[#allocation8 + $0x3b8] sm:$0xff]
        %v1586 = vld [vmem:[#allocation8 + $0x3c0] sm:$0xff]
        %v1587 = vld [vmem:[#allocation8 + $0x3c8] sm:$0xff]
        %v1588 = vld [vmem:[#allocation8 + $0x3d0] sm:$0xff]
        %v1589 = vld [vmem:[#allocation8 + $0x3d8] sm:$0xff]
        %v1590 = vld [vmem:[#allocation8 + $0x3e0] sm:$0xff]
        %v1591 = vld [vmem:[#allocation8 + $0x3e8] sm:$0xff]
        %v1592 = vld [vmem:[#allocation8 + $0x3f0] sm:$0xff]
        %v1593 = vld [vmem:[#allocation8 + $0x3f8] sm:$0xff]
        %v1594 = vld [vmem:[%s4] sm:$0xf]
        %v1596 = vlaneseq
        %v1597 = vshrl.u32 %v1596, 7
        %v1598 = vsub.s32 0, %v1597
        %v1599 = vrot.slane %v1594, %v1598
        %v1600 = vlaneseq
        %v1601 = vshrl.u32 %v1600, 7
        %v1602 = vsub.s32 1, %v1601
        %v1603 = vrot.slane %v1594, %v1602
        %v1604 = vlaneseq
        %v1605 = vshrl.u32 %v1604, 7
        %v1606 = vsub.s32 2, %v1605
        %v1607 = vrot.slane %v1594, %v1606
        %v1608 = vlaneseq
        %v1609 = vshrl.u32 %v1608, 7
        %v1610 = vsub.s32 3, %v1609
        %v1611 = vrot.slane %v1594, %v1610
        %v1744 = vunpack.c.l.b16 %v1466
        %v1745 = vunpack.c.h.b16 %v1466
        %v1746 = vunpack.c.l.b16 %v1467
        %v1747 = vunpack.c.h.b16 %v1467
        %v1748 = vunpack.c.l.b16 %v1468
        %v1749 = vunpack.c.h.b16 %v1468
        %v1750 = vunpack.c.l.b16 %v1469
        %v1751 = vunpack.c.h.b16 %v1469
        %v1752 = vunpack.c.l.b16 %v1470
        %v1753 = vunpack.c.h.b16 %v1470
        %v1754 = vunpack.c.l.b16 %v1471
        %v1755 = vunpack.c.h.b16 %v1471
        %v1756 = vunpack.c.l.b16 %v1472
        %v1757 = vunpack.c.h.b16 %v1472
        %v1758 = vunpack.c.l.b16 %v1473
        %v1759 = vunpack.c.h.b16 %v1473
        %v1760 = vunpack.c.l.b16 %v1474
        %v1761 = vunpack.c.h.b16 %v1474
        %v1762 = vunpack.c.l.b16 %v1475
        %v1763 = vunpack.c.h.b16 %v1475
        %v1764 = vunpack.c.l.b16 %v1476
        %v1765 = vunpack.c.h.b16 %v1476
        %v1766 = vunpack.c.l.b16 %v1477
        %v1767 = vunpack.c.h.b16 %v1477
        %v1768 = vunpack.c.l.b16 %v1478
        %v1769 = vunpack.c.h.b16 %v1478
        %v1770 = vunpack.c.l.b16 %v1479
        %v1771 = vunpack.c.h.b16 %v1479
        %v1772 = vunpack.c.l.b16 %v1480
        %v1773 = vunpack.c.h.b16 %v1480
        %v1774 = vunpack.c.l.b16 %v1481
        %v1775 = vunpack.c.h.b16 %v1481
        %v1776 = vunpack.c.l.b16 %v1482
        %v1777 = vunpack.c.h.b16 %v1482
        %v1778 = vunpack.c.l.b16 %v1483
        %v1779 = vunpack.c.h.b16 %v1483
        %v1780 = vunpack.c.l.b16 %v1484
        %v1781 = vunpack.c.h.b16 %v1484
        %v1782 = vunpack.c.l.b16 %v1485
        %v1783 = vunpack.c.h.b16 %v1485
        %v1784 = vunpack.c.l.b16 %v1486
        %v1785 = vunpack.c.h.b16 %v1486
        %v1786 = vunpack.c.l.b16 %v1487
        %v1787 = vunpack.c.h.b16 %v1487
        %v1788 = vunpack.c.l.b16 %v1488
        %v1789 = vunpack.c.h.b16 %v1488
        %v1790 = vunpack.c.l.b16 %v1489
        %v1791 = vunpack.c.h.b16 %v1489
        %v1792 = vunpack.c.l.b16 %v1490
        %v1793 = vunpack.c.h.b16 %v1490
        %v1794 = vunpack.c.l.b16 %v1491
        %v1795 = vunpack.c.h.b16 %v1491
        %v1796 = vunpack.c.l.b16 %v1492
        %v1797 = vunpack.c.h.b16 %v1492
        %v1798 = vunpack.c.l.b16 %v1493
        %v1799 = vunpack.c.h.b16 %v1493
        %v1800 = vunpack.c.l.b16 %v1494
        %v1801 = vunpack.c.h.b16 %v1494
        %v1802 = vunpack.c.l.b16 %v1495
        %v1803 = vunpack.c.h.b16 %v1495
        %v1804 = vunpack.c.l.b16 %v1496
        %v1805 = vunpack.c.h.b16 %v1496
        %v1806 = vunpack.c.l.b16 %v1497
        %v1807 = vunpack.c.h.b16 %v1497
        %v1808 = vunpack.c.l.b16 %v1498
        %v1809 = vunpack.c.h.b16 %v1498
        %v1810 = vunpack.c.l.b16 %v1499
        %v1811 = vunpack.c.h.b16 %v1499
        %v1812 = vunpack.c.l.b16 %v1500
        %v1813 = vunpack.c.h.b16 %v1500
        %v1814 = vunpack.c.l.b16 %v1501
        %v1815 = vunpack.c.h.b16 %v1501
        %v1816 = vunpack.c.l.b16 %v1502
        %v1817 = vunpack.c.h.b16 %v1502
        %v1818 = vunpack.c.l.b16 %v1503
        %v1819 = vunpack.c.h.b16 %v1503
        %v1820 = vunpack.c.l.b16 %v1504
        %v1821 = vunpack.c.h.b16 %v1504
        %v1822 = vunpack.c.l.b16 %v1505
        %v1823 = vunpack.c.h.b16 %v1505
        %v1824 = vunpack.c.l.b16 %v1506
        %v1825 = vunpack.c.h.b16 %v1506
        %v1826 = vunpack.c.l.b16 %v1507
        %v1827 = vunpack.c.h.b16 %v1507
        %v1828 = vunpack.c.l.b16 %v1508
        %v1829 = vunpack.c.h.b16 %v1508
        %v1830 = vunpack.c.l.b16 %v1509
        %v1831 = vunpack.c.h.b16 %v1509
        %v1832 = vunpack.c.l.b16 %v1510
        %v1833 = vunpack.c.h.b16 %v1510
        %v1834 = vunpack.c.l.b16 %v1511
        %v1835 = vunpack.c.h.b16 %v1511
        %v1836 = vunpack.c.l.b16 %v1512
        %v1837 = vunpack.c.h.b16 %v1512
        %v1838 = vunpack.c.l.b16 %v1513
        %v1839 = vunpack.c.h.b16 %v1513
        %v1840 = vunpack.c.l.b16 %v1514
        %v1841 = vunpack.c.h.b16 %v1514
        %v1842 = vunpack.c.l.b16 %v1515
        %v1843 = vunpack.c.h.b16 %v1515
        %v1844 = vunpack.c.l.b16 %v1516
        %v1845 = vunpack.c.h.b16 %v1516
        %v1846 = vunpack.c.l.b16 %v1517
        %v1847 = vunpack.c.h.b16 %v1517
        %v1848 = vunpack.c.l.b16 %v1518
        %v1849 = vunpack.c.h.b16 %v1518
        %v1850 = vunpack.c.l.b16 %v1519
        %v1851 = vunpack.c.h.b16 %v1519
        %v1852 = vunpack.c.l.b16 %v1520
        %v1853 = vunpack.c.h.b16 %v1520
        %v1854 = vunpack.c.l.b16 %v1521
        %v1855 = vunpack.c.h.b16 %v1521
        %v1856 = vunpack.c.l.b16 %v1522
        %v1857 = vunpack.c.h.b16 %v1522
        %v1858 = vunpack.c.l.b16 %v1523
        %v1859 = vunpack.c.h.b16 %v1523
        %v1860 = vunpack.c.l.b16 %v1524
        %v1861 = vunpack.c.h.b16 %v1524
        %v1862 = vunpack.c.l.b16 %v1525
        %v1863 = vunpack.c.h.b16 %v1525
        %v1864 = vunpack.c.l.b16 %v1526
        %v1865 = vunpack.c.h.b16 %v1526
        %v1866 = vunpack.c.l.b16 %v1527
        %v1867 = vunpack.c.h.b16 %v1527
        %v1868 = vunpack.c.l.b16 %v1528
        %v1869 = vunpack.c.h.b16 %v1528
        %v1870 = vunpack.c.l.b16 %v1529
        %v1871 = vunpack.c.h.b16 %v1529
        %v1872 = vunpack.c.l.b16 %v1530
        %v1873 = vunpack.c.h.b16 %v1530
        %v1874 = vunpack.c.l.b16 %v1531
        %v1875 = vunpack.c.h.b16 %v1531
        %v1876 = vunpack.c.l.b16 %v1532
        %v1877 = vunpack.c.h.b16 %v1532
        %v1878 = vunpack.c.l.b16 %v1533
        %v1879 = vunpack.c.h.b16 %v1533
        %v1880 = vunpack.c.l.b16 %v1534
        %v1881 = vunpack.c.h.b16 %v1534
        %v1882 = vunpack.c.l.b16 %v1535
        %v1883 = vunpack.c.h.b16 %v1535
        %v1884 = vunpack.c.l.b16 %v1536
        %v1885 = vunpack.c.h.b16 %v1536
        %v1886 = vunpack.c.l.b16 %v1537
        %v1887 = vunpack.c.h.b16 %v1537
        %v1888 = vunpack.c.l.b16 %v1538
        %v1889 = vunpack.c.h.b16 %v1538
        %v1890 = vunpack.c.l.b16 %v1539
        %v1891 = vunpack.c.h.b16 %v1539
        %v1892 = vunpack.c.l.b16 %v1540
        %v1893 = vunpack.c.h.b16 %v1540
        %v1894 = vunpack.c.l.b16 %v1541
        %v1895 = vunpack.c.h.b16 %v1541
        %v1896 = vunpack.c.l.b16 %v1542
        %v1897 = vunpack.c.h.b16 %v1542
        %v1898 = vunpack.c.l.b16 %v1543
        %v1899 = vunpack.c.h.b16 %v1543
        %v1900 = vunpack.c.l.b16 %v1544
        %v1901 = vunpack.c.h.b16 %v1544
        %v1902 = vunpack.c.l.b16 %v1545
        %v1903 = vunpack.c.h.b16 %v1545
        %v1904 = vunpack.c.l.b16 %v1546
        %v1905 = vunpack.c.h.b16 %v1546
        %v1906 = vunpack.c.l.b16 %v1547
        %v1907 = vunpack.c.h.b16 %v1547
        %v1908 = vunpack.c.l.b16 %v1548
        %v1909 = vunpack.c.h.b16 %v1548
        %v1910 = vunpack.c.l.b16 %v1549
        %v1911 = vunpack.c.h.b16 %v1549
        %v1912 = vunpack.c.l.b16 %v1550
        %v1913 = vunpack.c.h.b16 %v1550
        %v1914 = vunpack.c.l.b16 %v1551
        %v1915 = vunpack.c.h.b16 %v1551
        %v1916 = vunpack.c.l.b16 %v1552
        %v1917 = vunpack.c.h.b16 %v1552
        %v1918 = vunpack.c.l.b16 %v1553
        %v1919 = vunpack.c.h.b16 %v1553
        %v1920 = vunpack.c.l.b16 %v1554
        %v1921 = vunpack.c.h.b16 %v1554
        %v1922 = vunpack.c.l.b16 %v1555
        %v1923 = vunpack.c.h.b16 %v1555
        %v1924 = vunpack.c.l.b16 %v1556
        %v1925 = vunpack.c.h.b16 %v1556
        %v1926 = vunpack.c.l.b16 %v1557
        %v1927 = vunpack.c.h.b16 %v1557
        %v1928 = vunpack.c.l.b16 %v1558
        %v1929 = vunpack.c.h.b16 %v1558
        %v1930 = vunpack.c.l.b16 %v1559
        %v1931 = vunpack.c.h.b16 %v1559
        %v1932 = vunpack.c.l.b16 %v1560
        %v1933 = vunpack.c.h.b16 %v1560
        %v1934 = vunpack.c.l.b16 %v1561
        %v1935 = vunpack.c.h.b16 %v1561
        %v1936 = vunpack.c.l.b16 %v1562
        %v1937 = vunpack.c.h.b16 %v1562
        %v1938 = vunpack.c.l.b16 %v1563
        %v1939 = vunpack.c.h.b16 %v1563
        %v1940 = vunpack.c.l.b16 %v1564
        %v1941 = vunpack.c.h.b16 %v1564
        %v1942 = vunpack.c.l.b16 %v1565
        %v1943 = vunpack.c.h.b16 %v1565
        %v1944 = vunpack.c.l.b16 %v1566
        %v1945 = vunpack.c.h.b16 %v1566
        %v1946 = vunpack.c.l.b16 %v1567
        %v1947 = vunpack.c.h.b16 %v1567
        %v1948 = vunpack.c.l.b16 %v1568
        %v1949 = vunpack.c.h.b16 %v1568
        %v1950 = vunpack.c.l.b16 %v1569
        %v1951 = vunpack.c.h.b16 %v1569
        %v1952 = vunpack.c.l.b16 %v1570
        %v1953 = vunpack.c.h.b16 %v1570
        %v1954 = vunpack.c.l.b16 %v1571
        %v1955 = vunpack.c.h.b16 %v1571
        %v1956 = vunpack.c.l.b16 %v1572
        %v1957 = vunpack.c.h.b16 %v1572
        %v1958 = vunpack.c.l.b16 %v1573
        %v1959 = vunpack.c.h.b16 %v1573
        %v1960 = vunpack.c.l.b16 %v1574
        %v1961 = vunpack.c.h.b16 %v1574
        %v1962 = vunpack.c.l.b16 %v1575
        %v1963 = vunpack.c.h.b16 %v1575
        %v1964 = vunpack.c.l.b16 %v1576
        %v1965 = vunpack.c.h.b16 %v1576
        %v1966 = vunpack.c.l.b16 %v1577
        %v1967 = vunpack.c.h.b16 %v1577
        %v1968 = vunpack.c.l.b16 %v1578
        %v1969 = vunpack.c.h.b16 %v1578
        %v1970 = vunpack.c.l.b16 %v1579
        %v1971 = vunpack.c.h.b16 %v1579
        %v1972 = vunpack.c.l.b16 %v1580
        %v1973 = vunpack.c.h.b16 %v1580
        %v1974 = vunpack.c.l.b16 %v1581
        %v1975 = vunpack.c.h.b16 %v1581
        %v1976 = vunpack.c.l.b16 %v1582
        %v1977 = vunpack.c.h.b16 %v1582
        %v1978 = vunpack.c.l.b16 %v1583
        %v1979 = vunpack.c.h.b16 %v1583
        %v1980 = vunpack.c.l.b16 %v1584
        %v1981 = vunpack.c.h.b16 %v1584
        %v1982 = vunpack.c.l.b16 %v1585
        %v1983 = vunpack.c.h.b16 %v1585
        %v1984 = vunpack.c.l.b16 %v1586
        %v1985 = vunpack.c.h.b16 %v1586
        %v1986 = vunpack.c.l.b16 %v1587
        %v1987 = vunpack.c.h.b16 %v1587
        %v1988 = vunpack.c.l.b16 %v1588
        %v1989 = vunpack.c.h.b16 %v1588
        %v1990 = vunpack.c.l.b16 %v1589
        %v1991 = vunpack.c.h.b16 %v1589
        %v1992 = vunpack.c.l.b16 %v1590
        %v1993 = vunpack.c.h.b16 %v1590
        %v1994 = vunpack.c.l.b16 %v1591
        %v1995 = vunpack.c.h.b16 %v1591
        %v1996 = vunpack.c.l.b16 %v1592
        %v1997 = vunpack.c.h.b16 %v1592
        %v1998 = vunpack.c.l.b16 %v1593
        %v1999 = vunpack.c.h.b16 %v1593
        %v2000 = vpack.c.b16 %v1748, %v1744
        %v2001 = vpack.c.b16 %v1749, %v1745
        %v2002 = vpack.c.b16 %v1750, %v1746
        %v2003 = vpack.c.b16 %v1751, %v1747
        %v2004 = vpack.c.b16 %v1756, %v1752
        %v2005 = vpack.c.b16 %v1757, %v1753
        %v2006 = vpack.c.b16 %v1758, %v1754
        %v2007 = vpack.c.b16 %v1759, %v1755
        %v2008 = vpack.c.b16 %v1764, %v1760
        %v2009 = vpack.c.b16 %v1765, %v1761
        %v2010 = vpack.c.b16 %v1766, %v1762
        %v2011 = vpack.c.b16 %v1767, %v1763
        %v2012 = vpack.c.b16 %v1772, %v1768
        %v2013 = vpack.c.b16 %v1773, %v1769
        %v2014 = vpack.c.b16 %v1774, %v1770
        %v2015 = vpack.c.b16 %v1775, %v1771
        %v2016 = vpack.c.b16 %v1780, %v1776
        %v2017 = vpack.c.b16 %v1781, %v1777
        %v2018 = vpack.c.b16 %v1782, %v1778
        %v2019 = vpack.c.b16 %v1783, %v1779
        %v2020 = vpack.c.b16 %v1788, %v1784
        %v2021 = vpack.c.b16 %v1789, %v1785
        %v2022 = vpack.c.b16 %v1790, %v1786
        %v2023 = vpack.c.b16 %v1791, %v1787
        %v2024 = vpack.c.b16 %v1796, %v1792
        %v2025 = vpack.c.b16 %v1797, %v1793
        %v2026 = vpack.c.b16 %v1798, %v1794
        %v2027 = vpack.c.b16 %v1799, %v1795
        %v2028 = vpack.c.b16 %v1804, %v1800
        %v2029 = vpack.c.b16 %v1805, %v1801
        %v2030 = vpack.c.b16 %v1806, %v1802
        %v2031 = vpack.c.b16 %v1807, %v1803
        %v2032 = vpack.c.b16 %v1812, %v1808
        %v2033 = vpack.c.b16 %v1813, %v1809
        %v2034 = vpack.c.b16 %v1814, %v1810
        %v2035 = vpack.c.b16 %v1815, %v1811
        %v2036 = vpack.c.b16 %v1820, %v1816
        %v2037 = vpack.c.b16 %v1821, %v1817
        %v2038 = vpack.c.b16 %v1822, %v1818
        %v2039 = vpack.c.b16 %v1823, %v1819
        %v2040 = vpack.c.b16 %v1828, %v1824
        %v2041 = vpack.c.b16 %v1829, %v1825
        %v2042 = vpack.c.b16 %v1830, %v1826
        %v2043 = vpack.c.b16 %v1831, %v1827
        %v2044 = vpack.c.b16 %v1836, %v1832
        %v2045 = vpack.c.b16 %v1837, %v1833
        %v2046 = vpack.c.b16 %v1838, %v1834
        %v2047 = vpack.c.b16 %v1839, %v1835
        %v2048 = vpack.c.b16 %v1844, %v1840
        %v2049 = vpack.c.b16 %v1845, %v1841
        %v2050 = vpack.c.b16 %v1846, %v1842
        %v2051 = vpack.c.b16 %v1847, %v1843
        %v2052 = vpack.c.b16 %v1852, %v1848
        %v2053 = vpack.c.b16 %v1853, %v1849
        %v2054 = vpack.c.b16 %v1854, %v1850
        %v2055 = vpack.c.b16 %v1855, %v1851
        %v2056 = vpack.c.b16 %v1860, %v1856
        %v2057 = vpack.c.b16 %v1861, %v1857
        %v2058 = vpack.c.b16 %v1862, %v1858
        %v2059 = vpack.c.b16 %v1863, %v1859
        %v2060 = vpack.c.b16 %v1868, %v1864
        %v2061 = vpack.c.b16 %v1869, %v1865
        %v2062 = vpack.c.b16 %v1870, %v1866
        %v2063 = vpack.c.b16 %v1871, %v1867
        %v2064 = vpack.c.b16 %v1876, %v1872
        %v2065 = vpack.c.b16 %v1877, %v1873
        %v2066 = vpack.c.b16 %v1878, %v1874
        %v2067 = vpack.c.b16 %v1879, %v1875
        %v2068 = vpack.c.b16 %v1884, %v1880
        %v2069 = vpack.c.b16 %v1885, %v1881
        %v2070 = vpack.c.b16 %v1886, %v1882
        %v2071 = vpack.c.b16 %v1887, %v1883
        %v2072 = vpack.c.b16 %v1892, %v1888
        %v2073 = vpack.c.b16 %v1893, %v1889
        %v2074 = vpack.c.b16 %v1894, %v1890
        %v2075 = vpack.c.b16 %v1895, %v1891
        %v2076 = vpack.c.b16 %v1900, %v1896
        %v2077 = vpack.c.b16 %v1901, %v1897
        %v2078 = vpack.c.b16 %v1902, %v1898
        %v2079 = vpack.c.b16 %v1903, %v1899
        %v2080 = vpack.c.b16 %v1908, %v1904
        %v2081 = vpack.c.b16 %v1909, %v1905
        %v2082 = vpack.c.b16 %v1910, %v1906
        %v2083 = vpack.c.b16 %v1911, %v1907
        %v2084 = vpack.c.b16 %v1916, %v1912
        %v2085 = vpack.c.b16 %v1917, %v1913
        %v2086 = vpack.c.b16 %v1918, %v1914
        %v2087 = vpack.c.b16 %v1919, %v1915
        %v2088 = vpack.c.b16 %v1924, %v1920
        %v2089 = vpack.c.b16 %v1925, %v1921
        %v2090 = vpack.c.b16 %v1926, %v1922
        %v2091 = vpack.c.b16 %v1927, %v1923
        %v2092 = vpack.c.b16 %v1932, %v1928
        %v2093 = vpack.c.b16 %v1933, %v1929
        %v2094 = vpack.c.b16 %v1934, %v1930
        %v2095 = vpack.c.b16 %v1935, %v1931
        %v2096 = vpack.c.b16 %v1940, %v1936
        %v2097 = vpack.c.b16 %v1941, %v1937
        %v2098 = vpack.c.b16 %v1942, %v1938
        %v2099 = vpack.c.b16 %v1943, %v1939
        %v2100 = vpack.c.b16 %v1948, %v1944
        %v2101 = vpack.c.b16 %v1949, %v1945
        %v2102 = vpack.c.b16 %v1950, %v1946
        %v2103 = vpack.c.b16 %v1951, %v1947
        %v2104 = vpack.c.b16 %v1956, %v1952
        %v2105 = vpack.c.b16 %v1957, %v1953
        %v2106 = vpack.c.b16 %v1958, %v1954
        %v2107 = vpack.c.b16 %v1959, %v1955
        %v2108 = vpack.c.b16 %v1964, %v1960
        %v2109 = vpack.c.b16 %v1965, %v1961
        %v2110 = vpack.c.b16 %v1966, %v1962
        %v2111 = vpack.c.b16 %v1967, %v1963
        %v2112 = vpack.c.b16 %v1972, %v1968
        %v2113 = vpack.c.b16 %v1973, %v1969
        %v2114 = vpack.c.b16 %v1974, %v1970
        %v2115 = vpack.c.b16 %v1975, %v1971
        %v2116 = vpack.c.b16 %v1980, %v1976
        %v2117 = vpack.c.b16 %v1981, %v1977
        %v2118 = vpack.c.b16 %v1982, %v1978
        %v2119 = vpack.c.b16 %v1983, %v1979
        %v2120 = vpack.c.b16 %v1988, %v1984
        %v2121 = vpack.c.b16 %v1989, %v1985
        %v2122 = vpack.c.b16 %v1990, %v1986
        %v2123 = vpack.c.b16 %v1991, %v1987
        %v2124 = vpack.c.b16 %v1996, %v1992
        %v2125 = vpack.c.b16 %v1997, %v1993
        %v2126 = vpack.c.b16 %v1998, %v1994
        %v2127 = vpack.c.b16 %v1999, %v1995
        %2256 = vmatprep.subr.bf16.mxu0 %v2029
        %2257 = vmatpush1.bf16.msra.mxu0 %v2028
        %2258 = vmatprep.subr.bf16.mxu0 %v2025
        %2259 = vmatpush1.bf16.msra.mxu0 %v2024
        %2260 = vmatprep.subr.bf16.mxu0 %v2021
        %2261 = vmatpush1.bf16.msra.mxu0 %v2020
        %2262 = vmatprep.subr.bf16.mxu0 %v2017
        %2263 = vmatpush1.bf16.msra.mxu0 %v2016
        %2264 = vmatprep.subr.bf16.mxu0 %v2013
        %2265 = vmatpush1.bf16.msra.mxu0 %v2012
        %2266 = vmatprep.subr.bf16.mxu0 %v2009
        %2267 = vmatpush1.bf16.msra.mxu0 %v2008
        %2268 = vmatprep.subr.bf16.mxu0 %v2005
        %2269 = vmatpush1.bf16.msra.mxu0 %v2004
        %2270 = vmatprep.subr.bf16.mxu0 %v2001
        %2271 = vmatpush1.bf16.msra.mxu0 %v2000
        %2272 = vmatprep.subr.bf16.mxu0 %v2061
        %2273 = vmatpush2.bf16.msra.mxu0 %v2060
        %2274 = vmatprep.subr.bf16.mxu0 %v2057
        %2275 = vmatpush2.bf16.msra.mxu0 %v2056
        %2276 = vmatprep.subr.bf16.mxu0 %v2053
        %2277 = vmatpush2.bf16.msra.mxu0 %v2052
        %2278 = vmatprep.subr.bf16.mxu0 %v2049
        %2279 = vmatpush2.bf16.msra.mxu0 %v2048
        %2280 = vmatprep.subr.bf16.mxu0 %v2045
        %2281 = vmatpush2.bf16.msra.mxu0 %v2044
        %2282 = vmatprep.subr.bf16.mxu0 %v2041
        %2283 = vmatpush2.bf16.msra.mxu0 %v2040
        %2284 = vmatprep.subr.bf16.mxu0 %v2037
        %2285 = vmatpush2.bf16.msra.mxu0 %v2036
        %2286 = vmatprep.subr.bf16.mxu0 %v2033
        %2287 = vmatpush2.bf16.msra.mxu0 %v2032
        %2288 = vmatprep.mubr.bf16.mxu0 %v1451
        %2289 = vmatmul.mubr.bf16.gmra.mxu0 %v1450
        %v2290 = vpop.f32.mrf.mxu0
        %v2291 = vadd.f32 %v1599, %v2290
        %v2292 = vpop.f32.mrf.mxu0
        %v2293 = vadd.f32 %v1603, %v2292
        %v2294 = vpop.f32.mrf.mxu0
        %v2295 = vadd.f32 %v1599, %v2294
        %v2296 = vpop.f32.mrf.mxu0
        %v2297 = vadd.f32 %v1603, %v2296
        %2298 = vmatprep.mubr.bf16.mxu0 %v1455
        %2299 = vmatmul.mubr.bf16.gmra.mxu0 %v1454
        %v2300 = vpop.f32.mrf.mxu0
        %v2301 = vadd.f32 %v1599, %v2300
        %v2302 = vpop.f32.mrf.mxu0
        %v2303 = vadd.f32 %v1603, %v2302
        %v2304 = vpop.f32.mrf.mxu0
        %v2305 = vadd.f32 %v1599, %v2304
        %v2306 = vpop.f32.mrf.mxu0
        %v2307 = vadd.f32 %v1603, %v2306
        %2308 = vmatprep.mubr.bf16.mxu0 %v1459
        %2309 = vmatmul.mubr.bf16.gmra.mxu0 %v1458
        %v2310 = vpop.f32.mrf.mxu0
        %v2311 = vadd.f32 %v1599, %v2310
        %v2312 = vpop.f32.mrf.mxu0
        %v2313 = vadd.f32 %v1603, %v2312
        %v2314 = vpop.f32.mrf.mxu0
        %v2315 = vadd.f32 %v1599, %v2314
        %v2316 = vpop.f32.mrf.mxu0
        %v2317 = vadd.f32 %v1603, %v2316
        %2318 = vmatprep.mubr.bf16.mxu0 %v1463
        %2319 = vmatmul.mubr.bf16.gmra.mxu0 %v1462
        %v2320 = vpop.f32.mrf.mxu0
        %v2321 = vadd.f32 %v1599, %v2320
        %v2322 = vpop.f32.mrf.mxu0
        %v2323 = vadd.f32 %v1603, %v2322
        %v2324 = vpop.f32.mrf.mxu0
        %v2325 = vadd.f32 %v1599, %v2324
        %v2326 = vpop.f32.mrf.mxu0
        %v2327 = vadd.f32 %v1603, %v2326
        %2328 = vdwg.mxu0
        %2329 = vmatprep.subr.bf16.mxu0 %v2093
        %2330 = vmatpush1.bf16.msra.mxu0 %v2092
        %2331 = vmatprep.subr.bf16.mxu0 %v2089
        %2332 = vmatpush1.bf16.msra.mxu0 %v2088
        %2333 = vmatprep.subr.bf16.mxu0 %v2085
        %2334 = vmatpush1.bf16.msra.mxu0 %v2084
        %2335 = vmatprep.subr.bf16.mxu0 %v2081
        %2336 = vmatpush1.bf16.msra.mxu0 %v2080
        %2337 = vmatprep.subr.bf16.mxu0 %v2077
        %2338 = vmatpush1.bf16.msra.mxu0 %v2076
        %2339 = vmatprep.subr.bf16.mxu0 %v2073
        %2340 = vmatpush1.bf16.msra.mxu0 %v2072
        %2341 = vmatprep.subr.bf16.mxu0 %v2069
        %2342 = vmatpush1.bf16.msra.mxu0 %v2068
        %2343 = vmatprep.subr.bf16.mxu0 %v2065
        %2344 = vmatpush1.bf16.msra.mxu0 %v2064
        %2345 = vmatprep.subr.bf16.mxu0 %v2125
        %2346 = vmatpush2.bf16.msra.mxu0 %v2124
        %2347 = vmatprep.subr.bf16.mxu0 %v2121
        %2348 = vmatpush2.bf16.msra.mxu0 %v2120
        %2349 = vmatprep.subr.bf16.mxu0 %v2117
        %2350 = vmatpush2.bf16.msra.mxu0 %v2116
        %2351 = vmatprep.subr.bf16.mxu0 %v2113
        %2352 = vmatpush2.bf16.msra.mxu0 %v2112
        %2353 = vmatprep.subr.bf16.mxu0 %v2109
        %2354 = vmatpush2.bf16.msra.mxu0 %v2108
        %2355 = vmatprep.subr.bf16.mxu0 %v2105
        %2356 = vmatpush2.bf16.msra.mxu0 %v2104
        %2357 = vmatprep.subr.bf16.mxu0 %v2101
        %2358 = vmatpush2.bf16.msra.mxu0 %v2100
        %2359 = vmatprep.subr.bf16.mxu0 %v2097
        %2360 = vmatpush2.bf16.msra.mxu0 %v2096
        %2361 = vmatprep.mubr.bf16.mxu0 %v1453
        %2362 = vmatmul.mubr.bf16.gmra.mxu0 %v1452
        %v2363 = vpop.f32.mrf.mxu0
        %v2364 = vadd.f32 %v2291, %v2363
        %v2365 = vpop.f32.mrf.mxu0
        %v2366 = vadd.f32 %v2293, %v2365
        %v2367 = vpop.f32.mrf.mxu0
        %v2368 = vadd.f32 %v2295, %v2367
        %v2369 = vpop.f32.mrf.mxu0
        %v2370 = vadd.f32 %v2297, %v2369
        %2371 = vmatprep.mubr.bf16.mxu0 %v1457
        %2372 = vmatmul.mubr.bf16.gmra.mxu0 %v1456
        %v2373 = vpop.f32.mrf.mxu0
        %v2374 = vadd.f32 %v2301, %v2373
        %v2375 = vpop.f32.mrf.mxu0
        %v2376 = vadd.f32 %v2303, %v2375
        %v2377 = vpop.f32.mrf.mxu0
        %v2378 = vadd.f32 %v2305, %v2377
        %v2379 = vpop.f32.mrf.mxu0
        %v2380 = vadd.f32 %v2307, %v2379
        %2381 = vmatprep.mubr.bf16.mxu0 %v1461
        %2382 = vmatmul.mubr.bf16.gmra.mxu0 %v1460
        %v2383 = vpop.f32.mrf.mxu0
        %v2384 = vadd.f32 %v2311, %v2383
        %v2385 = vpop.f32.mrf.mxu0
        %v2386 = vadd.f32 %v2313, %v2385
        %v2387 = vpop.f32.mrf.mxu0
        %v2388 = vadd.f32 %v2315, %v2387
        %v2389 = vpop.f32.mrf.mxu0
        %v2390 = vadd.f32 %v2317, %v2389
        %2391 = vmatprep.mubr.bf16.mxu0 %v1465
        %2392 = vmatmul.mubr.bf16.gmra.mxu0 %v1464
        %v2393 = vpop.f32.mrf.mxu0
        %v2394 = vadd.f32 %v2321, %v2393
        %v2395 = vpop.f32.mrf.mxu0
        %v2396 = vadd.f32 %v2323, %v2395
        %v2397 = vpop.f32.mrf.mxu0
        %v2398 = vadd.f32 %v2325, %v2397
        %v2399 = vpop.f32.mrf.mxu0
        %v2400 = vadd.f32 %v2327, %v2399
        %2401 = vdwg.mxu0
        %2402 = vmatprep.subr.bf16.mxu0 %v2031
        %2403 = vmatpush1.bf16.msra.mxu0 %v2030
        %2404 = vmatprep.subr.bf16.mxu0 %v2027
        %2405 = vmatpush1.bf16.msra.mxu0 %v2026
        %2406 = vmatprep.subr.bf16.mxu0 %v2023
        %2407 = vmatpush1.bf16.msra.mxu0 %v2022
        %2408 = vmatprep.subr.bf16.mxu0 %v2019
        %2409 = vmatpush1.bf16.msra.mxu0 %v2018
        %2410 = vmatprep.subr.bf16.mxu0 %v2015
        %2411 = vmatpush1.bf16.msra.mxu0 %v2014
        %2412 = vmatprep.subr.bf16.mxu0 %v2011
        %2413 = vmatpush1.bf16.msra.mxu0 %v2010
        %2414 = vmatprep.subr.bf16.mxu0 %v2007
        %2415 = vmatpush1.bf16.msra.mxu0 %v2006
        %2416 = vmatprep.subr.bf16.mxu0 %v2003
        %2417 = vmatpush1.bf16.msra.mxu0 %v2002
        %2418 = vmatprep.subr.bf16.mxu0 %v2063
        %2419 = vmatpush2.bf16.msra.mxu0 %v2062
        %2420 = vmatprep.subr.bf16.mxu0 %v2059
        %2421 = vmatpush2.bf16.msra.mxu0 %v2058
        %2422 = vmatprep.subr.bf16.mxu0 %v2055
        %2423 = vmatpush2.bf16.msra.mxu0 %v2054
        %2424 = vmatprep.subr.bf16.mxu0 %v2051
        %2425 = vmatpush2.bf16.msra.mxu0 %v2050
        %2426 = vmatprep.subr.bf16.mxu0 %v2047
        %2427 = vmatpush2.bf16.msra.mxu0 %v2046
        %2428 = vmatprep.subr.bf16.mxu0 %v2043
        %2429 = vmatpush2.bf16.msra.mxu0 %v2042
        %2430 = vmatprep.subr.bf16.mxu0 %v2039
        %2431 = vmatpush2.bf16.msra.mxu0 %v2038
        %2432 = vmatprep.subr.bf16.mxu0 %v2035
        %2433 = vmatpush2.bf16.msra.mxu0 %v2034
        %2434 = vmatprep.mubr.bf16.mxu0 %v1451
        %2435 = vmatmul.mubr.bf16.gmra.mxu0 %v1450
        %v2436 = vpop.f32.mrf.mxu0
        %v2437 = vadd.f32 %v1607, %v2436
        %v2438 = vpop.f32.mrf.mxu0
        %v2439 = vadd.f32 %v1611, %v2438
        %v2440 = vpop.f32.mrf.mxu0
        %v2441 = vadd.f32 %v1607, %v2440
        %v2442 = vpop.f32.mrf.mxu0
        %v2443 = vadd.f32 %v1611, %v2442
        %2444 = vmatprep.mubr.bf16.mxu0 %v1455
        %2445 = vmatmul.mubr.bf16.gmra.mxu0 %v1454
        %v2446 = vpop.f32.mrf.mxu0
        %v2447 = vadd.f32 %v1607, %v2446
        %v2448 = vpop.f32.mrf.mxu0
        %v2449 = vadd.f32 %v1611, %v2448
        %v2450 = vpop.f32.mrf.mxu0
        %v2451 = vadd.f32 %v1607, %v2450
        %v2452 = vpop.f32.mrf.mxu0
        %v2453 = vadd.f32 %v1611, %v2452
        %2454 = vmatprep.mubr.bf16.mxu0 %v1459
        %2455 = vmatmul.mubr.bf16.gmra.mxu0 %v1458
        %v2456 = vpop.f32.mrf.mxu0
        %v2457 = vadd.f32 %v1607, %v2456
        %v2458 = vpop.f32.mrf.mxu0
        %v2459 = vadd.f32 %v1611, %v2458
        %v2460 = vpop.f32.mrf.mxu0
        %v2461 = vadd.f32 %v1607, %v2460
        %v2462 = vpop.f32.mrf.mxu0
        %v2463 = vadd.f32 %v1611, %v2462
        %2464 = vmatprep.mubr.bf16.mxu0 %v1463
        %2465 = vmatmul.mubr.bf16.gmra.mxu0 %v1462
        %v2466 = vpop.f32.mrf.mxu0
        %v2467 = vadd.f32 %v1607, %v2466
        %v2468 = vpop.f32.mrf.mxu0
        %v2469 = vadd.f32 %v1611, %v2468
        %v2470 = vpop.f32.mrf.mxu0
        %v2471 = vadd.f32 %v1607, %v2470
        %v2472 = vpop.f32.mrf.mxu0
        %v2473 = vadd.f32 %v1611, %v2472
        %2474 = vdwg.mxu0
        %2475 = vmatprep.subr.bf16.mxu0 %v2095
        %2476 = vmatpush1.bf16.msra.mxu0 %v2094
        %2477 = vmatprep.subr.bf16.mxu0 %v2091
        %2478 = vmatpush1.bf16.msra.mxu0 %v2090
        %2479 = vmatprep.subr.bf16.mxu0 %v2087
        %2480 = vmatpush1.bf16.msra.mxu0 %v2086
        %2481 = vmatprep.subr.bf16.mxu0 %v2083
        %2482 = vmatpush1.bf16.msra.mxu0 %v2082
        %2483 = vmatprep.subr.bf16.mxu0 %v2079
        %2484 = vmatpush1.bf16.msra.mxu0 %v2078
        %2485 = vmatprep.subr.bf16.mxu0 %v2075
        %2486 = vmatpush1.bf16.msra.mxu0 %v2074
        %2487 = vmatprep.subr.bf16.mxu0 %v2071
        %2488 = vmatpush1.bf16.msra.mxu0 %v2070
        %2489 = vmatprep.subr.bf16.mxu0 %v2067
        %2490 = vmatpush1.bf16.msra.mxu0 %v2066
        %2491 = vmatprep.subr.bf16.mxu0 %v2127
        %2492 = vmatpush2.bf16.msra.mxu0 %v2126
        %2493 = vmatprep.subr.bf16.mxu0 %v2123
        %2494 = vmatpush2.bf16.msra.mxu0 %v2122
        %2495 = vmatprep.subr.bf16.mxu0 %v2119
        %2496 = vmatpush2.bf16.msra.mxu0 %v2118
        %2497 = vmatprep.subr.bf16.mxu0 %v2115
        %2498 = vmatpush2.bf16.msra.mxu0 %v2114
        %2499 = vmatprep.subr.bf16.mxu0 %v2111
        %2500 = vmatpush2.bf16.msra.mxu0 %v2110
        %2501 = vmatprep.subr.bf16.mxu0 %v2107
        %2502 = vmatpush2.bf16.msra.mxu0 %v2106
        %2503 = vmatprep.subr.bf16.mxu0 %v2103
        %2504 = vmatpush2.bf16.msra.mxu0 %v2102
        %2505 = vmatprep.subr.bf16.mxu0 %v2099
        %2506 = vmatpush2.bf16.msra.mxu0 %v2098
        %2507 = vmatprep.mubr.bf16.mxu0 %v1453
        %2508 = vmatmul.mubr.bf16.gmra.mxu0 %v1452
        %v2509 = vpop.f32.mrf.mxu0
        %v2510 = vadd.f32 %v2437, %v2509
        %v2511 = vpop.f32.mrf.mxu0
        %v2512 = vadd.f32 %v2439, %v2511
        %v2513 = vpop.f32.mrf.mxu0
        %v2514 = vadd.f32 %v2441, %v2513
        %v2515 = vpop.f32.mrf.mxu0
        %v2516 = vadd.f32 %v2443, %v2515
        %2517 = vmatprep.mubr.bf16.mxu0 %v1457
        %2518 = vmatmul.mubr.bf16.gmra.mxu0 %v1456
        %v2519 = vpop.f32.mrf.mxu0
        %v2520 = vadd.f32 %v2447, %v2519
        %v2521 = vpop.f32.mrf.mxu0
        %v2522 = vadd.f32 %v2449, %v2521
        %v2523 = vpop.f32.mrf.mxu0
        %v2524 = vadd.f32 %v2451, %v2523
        %v2525 = vpop.f32.mrf.mxu0
        %v2526 = vadd.f32 %v2453, %v2525
        %2527 = vmatprep.mubr.bf16.mxu0 %v1461
        %2528 = vmatmul.mubr.bf16.gmra.mxu0 %v1460
        %v2529 = vpop.f32.mrf.mxu0
        %v2530 = vadd.f32 %v2457, %v2529
        %v2531 = vpop.f32.mrf.mxu0
        %v2532 = vadd.f32 %v2459, %v2531
        %v2533 = vpop.f32.mrf.mxu0
        %v2534 = vadd.f32 %v2461, %v2533
        %v2535 = vpop.f32.mrf.mxu0
        %v2536 = vadd.f32 %v2463, %v2535
        %2537 = vmatprep.mubr.bf16.mxu0 %v1465
        %2538 = vmatmul.mubr.bf16.gmra.mxu0 %v1464
        %v2539 = vpop.f32.mrf.mxu0
        %v2540 = vadd.f32 %v2467, %v2539
        %v2541 = vpop.f32.mrf.mxu0
        %v2542 = vadd.f32 %v2469, %v2541
        %v2543 = vpop.f32.mrf.mxu0
        %v2544 = vadd.f32 %v2471, %v2543
        %v2545 = vpop.f32.mrf.mxu0
        %v2546 = vadd.f32 %v2473, %v2545
        %2547 = vdwg.mxu0
        %v2548 = vadd.f32 %v2364, %v288
        %v2549 = vadd.f32 %v2366, %v289
        %v2550 = vadd.f32 %v2510, %v290
        %v2551 = vadd.f32 %v2512, %v291
        %v2552 = vadd.f32 %v2368, %v292
        %v2553 = vadd.f32 %v2370, %v293
        %v2554 = vadd.f32 %v2514, %v294
        %v2555 = vadd.f32 %v2516, %v295
        %v2556 = vadd.f32 %v2374, %v296
        %v2557 = vadd.f32 %v2376, %v297
        %v2558 = vadd.f32 %v2520, %v298
        %v2559 = vadd.f32 %v2522, %v299
        %v2560 = vadd.f32 %v2378, %v300
        %v2561 = vadd.f32 %v2380, %v301
        %v2562 = vadd.f32 %v2524, %v302
        %v2563 = vadd.f32 %v2526, %v303
        %v2564 = vadd.f32 %v2384, %v304
        %v2565 = vadd.f32 %v2386, %v305
        %v2566 = vadd.f32 %v2530, %v306
        %v2567 = vadd.f32 %v2532, %v307
        %v2568 = vadd.f32 %v2388, %v308
        %v2569 = vadd.f32 %v2390, %v309
        %v2570 = vadd.f32 %v2534, %v310
        %v2571 = vadd.f32 %v2536, %v311
        %v2572 = vadd.f32 %v2394, %v312
        %v2573 = vadd.f32 %v2396, %v313
        %v2574 = vadd.f32 %v2540, %v314
        %v2575 = vadd.f32 %v2542, %v315
        %v2576 = vadd.f32 %v2398, %v316
        %v2577 = vadd.f32 %v2400, %v317
        %v2578 = vadd.f32 %v2544, %v318
        %v2579 = vadd.f32 %v2546, %v319
        %v2580 = vmax.f32 %v2548, 0.0
        %v2581 = vmax.f32 %v2549, 0.0
        %v2582 = vmax.f32 %v2550, 0.0
        %v2583 = vmax.f32 %v2551, 0.0
        %v2584 = vmax.f32 %v2552, 0.0
        %v2585 = vmax.f32 %v2553, 0.0
        %v2586 = vmax.f32 %v2554, 0.0
        %v2587 = vmax.f32 %v2555, 0.0
        %v2588 = vmax.f32 %v2556, 0.0
        %v2589 = vmax.f32 %v2557, 0.0
        %v2590 = vmax.f32 %v2558, 0.0
        %v2591 = vmax.f32 %v2559, 0.0
        %v2592 = vmax.f32 %v2560, 0.0
        %v2593 = vmax.f32 %v2561, 0.0
        %v2594 = vmax.f32 %v2562, 0.0
        %v2595 = vmax.f32 %v2563, 0.0
        %v2596 = vmax.f32 %v2564, 0.0
        %v2597 = vmax.f32 %v2565, 0.0
        %v2598 = vmax.f32 %v2566, 0.0
        %v2599 = vmax.f32 %v2567, 0.0
        %v2600 = vmax.f32 %v2568, 0.0
        %v2601 = vmax.f32 %v2569, 0.0
        %v2602 = vmax.f32 %v2570, 0.0
        %v2603 = vmax.f32 %v2571, 0.0
        %v2604 = vmax.f32 %v2572, 0.0
        %v2605 = vmax.f32 %v2573, 0.0
        %v2606 = vmax.f32 %v2574, 0.0
        %v2607 = vmax.f32 %v2575, 0.0
        %v2608 = vmax.f32 %v2576, 0.0
        %v2609 = vmax.f32 %v2577, 0.0
        %v2610 = vmax.f32 %v2578, 0.0
        %v2611 = vmax.f32 %v2579, 0.0
        %v2612 = vpack.c.bf16 %v2584, %v2580
        %v2613 = vpack.c.bf16 %v2585, %v2581
        %v2614 = vpack.c.bf16 %v2586, %v2582
        %v2615 = vpack.c.bf16 %v2587, %v2583
        %v2616 = vpack.c.bf16 %v2592, %v2588
        %v2617 = vpack.c.bf16 %v2593, %v2589
        %v2618 = vpack.c.bf16 %v2594, %v2590
        %v2619 = vpack.c.bf16 %v2595, %v2591
        %v2620 = vpack.c.bf16 %v2600, %v2596
        %v2621 = vpack.c.bf16 %v2601, %v2597
        %v2622 = vpack.c.bf16 %v2602, %v2598
        %v2623 = vpack.c.bf16 %v2603, %v2599
        %v2624 = vpack.c.bf16 %v2608, %v2604
        %v2625 = vpack.c.bf16 %v2609, %v2605
        %v2626 = vpack.c.bf16 %v2610, %v2606
        %v2627 = vpack.c.bf16 %v2611, %v2607
        %v2644 = vunpack.c.l.b16 %v2612
        %v2645 = vunpack.c.l.b16 %v2613
        %v2646 = vunpack.c.l.b16 %v2614
        %v2647 = vunpack.c.l.b16 %v2615
        %v2648 = vunpack.c.h.b16 %v2612
        %v2649 = vunpack.c.h.b16 %v2613
        %v2650 = vunpack.c.h.b16 %v2614
        %v2651 = vunpack.c.h.b16 %v2615
        %v2652 = vunpack.c.l.b16 %v2616
        %v2653 = vunpack.c.l.b16 %v2617
        %v2654 = vunpack.c.l.b16 %v2618
        %v2655 = vunpack.c.l.b16 %v2619
        %v2656 = vunpack.c.h.b16 %v2616
        %v2657 = vunpack.c.h.b16 %v2617
        %v2658 = vunpack.c.h.b16 %v2618
        %v2659 = vunpack.c.h.b16 %v2619
        %v2660 = vunpack.c.l.b16 %v2620
        %v2661 = vunpack.c.l.b16 %v2621
        %v2662 = vunpack.c.l.b16 %v2622
        %v2663 = vunpack.c.l.b16 %v2623
        %v2664 = vunpack.c.h.b16 %v2620
        %v2665 = vunpack.c.h.b16 %v2621
        %v2666 = vunpack.c.h.b16 %v2622
        %v2667 = vunpack.c.h.b16 %v2623
        %v2668 = vunpack.c.l.b16 %v2624
        %v2669 = vunpack.c.l.b16 %v2625
        %v2670 = vunpack.c.l.b16 %v2626
        %v2671 = vunpack.c.l.b16 %v2627
        %v2672 = vunpack.c.h.b16 %v2624
        %v2673 = vunpack.c.h.b16 %v2625
        %v2674 = vunpack.c.h.b16 %v2626
        %v2675 = vunpack.c.h.b16 %v2627
        %v2676 = vpack.c.b16 %v2645, %v2644
        %v2677 = vpack.c.b16 %v2647, %v2646
        %v2678 = vpack.c.b16 %v2649, %v2648
        %v2679 = vpack.c.b16 %v2651, %v2650
        %v2680 = vpack.c.b16 %v2653, %v2652
        %v2681 = vpack.c.b16 %v2655, %v2654
        %v2682 = vpack.c.b16 %v2657, %v2656
        %v2683 = vpack.c.b16 %v2659, %v2658
        %v2684 = vpack.c.b16 %v2661, %v2660
        %v2685 = vpack.c.b16 %v2663, %v2662
        %v2686 = vpack.c.b16 %v2665, %v2664
        %v2687 = vpack.c.b16 %v2667, %v2666
        %v2688 = vpack.c.b16 %v2669, %v2668
        %v2689 = vpack.c.b16 %v2671, %v2670
        %v2690 = vpack.c.b16 %v2673, %v2672
        %v2691 = vpack.c.b16 %v2675, %v2674
        %2708 = vst [vmem:[%s285] sm:$0xff] %v2676
        %2709 = vst [vmem:[%s285 + $0x8] sm:$0xff] %v2677
        %2710 = vst [vmem:[%s285 + $0x10] sm:$0xff] %v2678
        %2711 = vst [vmem:[%s285 + $0x18] sm:$0xff] %v2679
        %2712 = vst [vmem:[%s285 + $0x20] sm:$0xff] %v2680
        %2713 = vst [vmem:[%s285 + $0x28] sm:$0xff] %v2681
        %2714 = vst [vmem:[%s285 + $0x30] sm:$0xff] %v2682
        %2715 = vst [vmem:[%s285 + $0x38] sm:$0xff] %v2683
        %2716 = vst [vmem:[%s285 + $0x40] sm:$0xff] %v2684
        %2717 = vst [vmem:[%s285 + $0x48] sm:$0xff] %v2685
        %2718 = vst [vmem:[%s285 + $0x50] sm:$0xff] %v2686
        %2719 = vst [vmem:[%s285 + $0x58] sm:$0xff] %v2687
        %2720 = vst [vmem:[%s285 + $0x60] sm:$0xff] %v2688
        %2721 = vst [vmem:[%s285 + $0x68] sm:$0xff] %v2689
        %2722 = vst [vmem:[%s285 + $0x70] sm:$0xff] %v2690
        %2723 = vst [vmem:[%s285 + $0x78] sm:$0xff] %v2691
        %s2724 = sand.u32 %s142, 1
        %s2725 = scalar_lea.sflag [#allocation4], %s2724
        %s2726 = sand.u32 %s142, 1
        %s2727 = smul.addr %s2726, 128
        %s2728 = scalar_lea.vmem [#allocation10], %s2727
        // Predicated region
        $region57: #{tpu_custom_call.1} parent=39 // pred_check
          %p2729 = pneg %p152
        $region58: #{tpu_custom_call.1} parent=39 // pred_check_branch
          %2731 = sbr.rel (%p2729) target = $region60
        $region59: #{tpu_custom_call.1} parent=39 // pred_region
          %s2732 = smul.u32 8, %s24
          %s2734 = ssub.s32 2048, 2048
          %2735 = vsyncadd %s2725, %s2734
          %s2736 = smul.addr %s2732, 4
          %s2737 = smul.addr %s2736, 64
          %s2738 = scalar_lea.hbm %s5, %s2737
          %s2739 = sshll.u32 %s2728, 4
          %s2740 = int_to_ptr.vmem [resolvable:$true] %s2739
          %2745 = dma.vmem_to_hbm [thread:$0]  %s2740, 2048, %s2738, %s2725, 256, 256, 16
        $region60: #{tpu_custom_call.1} parent=39 // pred_fallthru
          _
      $region40: #{tpu_custom_call.1} parent=5 // pred_fallthru
        _
      %p2746 = scmp.le.s32.totalorder 2, %s19
      // Predicated region
      $region61: #{tpu_custom_call.1} parent=5 // pred_check
        %p2747 = pneg %p2746
      $region62: #{tpu_custom_call.1} parent=5 // pred_check_branch
        %2749 = sbr.rel (%p2747) target = $region64
      $region63: #{tpu_custom_call.1} parent=5 // pred_region
        %s2750 = ssub.s32 %s19, 2
        // Predicated region
        $region65: #{tpu_custom_call.1} parent=63 // pred_check
          %p2751 = pneg %p158
        $region66: #{tpu_custom_call.1} parent=63 // pred_check_branch
          %2753 = sbr.rel (%p2751) target = $region68
        $region67: #{tpu_custom_call.1} parent=63 // pred_region
          %s2754 = sand.u32 %s143, 1
          %s2755 = scalar_lea.sflag [#allocation4], %s2754
          %s2756 = sand.u32 %s143, 1
          %s2757 = smul.addr %s2756, 128
          %s2758 = scalar_lea.vmem [#allocation10], %s2757
          %2759 = dma.done %s2755, 2048
        $region68: #{tpu_custom_call.1} parent=63 // pred_fallthru
          _
      $region64: #{tpu_custom_call.1} parent=5 // pred_fallthru
        _
    $region6: #{tpu_custom_call.1} parent=1 // loop_footer
      %s23 = sadd.s32 1, %s19
    $region7: #{tpu_custom_call.1} parent=1 // loop_footer_branch
      %18 = sbr.rel target = $region3
    $region8: #{tpu_custom_call.1} parent=1 // loop_exit
      _
    %2760 = vsyncpa [#allocation3], 1
    %s2761 = scalar_lea.sflag [#allocation3], 1
    %2762 = vsyncpa %s2761, 1
    %2763 = vsyncpa [#allocation6], 1
    %2764 = vsyncpa [#allocation9], 1
    %2765 = vsyncpa [#allocation4], 1
    %s2766 = scalar_lea.sflag [#allocation4], 1
    %2767 = vsyncpa %s2766, 1

</llo_original>
